<compile_context>
chip_gen: v5e
topology: v5e:2x2
jax: 0.10.0
libtpu: 0.0.40
codegen_flags: <defaults>
</compile_context>

<pallas_src>
import functools
import jax
import jax.numpy as jnp
from jax import lax
from jax.experimental import pallas as pl
from jax.experimental.pallas import tpu as pltpu
import numpy as np

# ---------------- config (small, consistent with the module) ----------------
B = 2          # batch
N_TXT = 8      # text sequence length
DIM = 32       # model dim
HEADS = 4
DIM_HEAD = 8
INNER = HEADS * DIM_HEAD       # 32
T_MEDIA = 2                    # number of media chunks
M_MEDIA = 4                    # tokens per media chunk
LN_EPS = 1e-5
ONLY_IMMEDIATE = True


def _mca_kernel(x_ref, med_ref, bias_ref, keep_ref, gb_ref, wqkv_ref, wout_ref, o_ref,
                *, heads, dim_head, use_bias, use_keep):
    bb, n, dim = x_ref.shape
    tm = med_ref.shape[1]

    x = x_ref[...].astype(jnp.float32)        # (bb, n, dim)
    med = med_ref[...].astype(jnp.float32)    # (bb, tm, dim)
    gb = gb_ref[...].astype(jnp.float32)      # (2, dim): [gamma; beta]

    # ---- LayerNorm over last dim (x path only; media is not normed) ----
    mean = jnp.mean(x, axis=-1, keepdims=True)
    var = jnp.mean((x - mean) ** 2, axis=-1, keepdims=True)
    xn = (x - mean) * lax.rsqrt(var + LN_EPS)
    xn = xn * gb[0:1] + gb[1:2]               # (1, dim) broadcasts over (bb, n, dim)

    # flatten leading dims for the projection matmuls (last dim untouched -> cheap)
    x2 = xn.reshape(bb * n, dim)
    m2 = med.reshape(bb * tm, dim)

    if use_bias:
        bias = bias_ref[...]                  # (bb, n, tm) additive mask bias (0 / -maxfloat)

    # ---- per-head attention: weights pre-split per head, no lane slicing ----
    acc = jnp.zeros((bb * n, dim), jnp.float32)
    for h in range(heads):
        # scale is already folded into the q weight slabs
        qh = jnp.dot(x2, wqkv_ref[h], preferred_element_type=jnp.float32)             # (bb*n, dh)
        kh = jnp.dot(m2, wqkv_ref[heads + h], preferred_element_type=jnp.float32)     # (bb*tm, dh)
        vh = jnp.dot(m2, wqkv_ref[2 * heads + h], preferred_element_type=jnp.float32) # (bb*tm, dh)

        qh = qh.reshape(bb, n, dim_head)
        kh = kh.reshape(bb, tm, dim_head)
        vh = vh.reshape(bb, tm, dim_head)

        sim = jnp.einsum('bnd,bmd->bnm', qh, kh,
                         preferred_element_type=jnp.float32)                          # (bb, n, tm)
        if use_bias:
            sim = sim + bias
        sim = sim - jnp.max(sim, axis=-1, keepdims=True)
        e = jnp.exp(sim)
        attn = e * pl.reciprocal(jnp.sum(e, axis=-1, keepdims=True), approx=True)

        oh = jnp.einsum('bnm,bmd->bnd', attn, vh,
                        preferred_element_type=jnp.float32)                           # (bb, n, dh)
        # output projection contribution of this head (sum over heads == concat @ Wout)
        acc = acc + jnp.dot(oh.reshape(bb * n, dim_head), wout_ref[h],
                            preferred_element_type=jnp.float32)                       # (bb*n, dim)

    out = acc.reshape(bb, n, dim)
    if use_keep:
        # rows whose text saw no media: attention (and thus the bias-free output) is 0
        out = out * keep_ref[...]             # (bb, n, 1) broadcast
    o_ref[...] = out.astype(o_ref.dtype)


def masked_cross_attention(x, media, media_locations, params,
                           *, heads=HEADS, dim_head=DIM_HEAD,
                           only_attend_immediate_media=ONLY_IMMEDIATE,
                           batch_blocks=1):
    """batch_blocks=1 (default): single grid step, best on 1-TC chips (v5e/v6e).
       batch_blocks=2: two "parallel" grid steps, one batch element per TC on v7x."""
    b, n, dim = x.shape
    _, t, m, _ = media.shape
    tm = t * m
    inner = heads * dim_head
    assert b % batch_blocks == 0
    bb = b // batch_blocks

    media_flat = media.reshape(b, tm, dim)                                   # 'b t n d -> b (t n) d'

    # ---- host-side mask prep (tiny; removes all integer/select ops from the kernel) ----
    use_mask = media_locations is not None
    neg_big = -jnp.finfo(jnp.float32).max
    if use_mask:
        text_time = jnp.cumsum(media_locations.astype(jnp.int32), axis=-1)   # (b, n)
        media_time = jnp.repeat(jnp.arange(1, t + 1, dtype=jnp.int32), m)    # (tm,)
        if only_attend_immediate_media:
            t2m = text_time[:, :, None] == media_time[None, None, :]
        else:
            t2m = text_time[:, :, None] >= media_time[None, None, :]
        bias = jnp.where(t2m, 0.0, neg_big).astype(jnp.float32)              # (b, n, tm)
        keep = (text_time != 0).astype(jnp.float32)[:, :, None]              # (b, n, 1)
    else:
        bias = jnp.zeros((b, n, tm), jnp.float32)
        keep = jnp.ones((b, n, 1), jnp.float32)

    # ---- host-side weight prep (free relative to the kernel) ----
    scale = dim_head ** (-0.5)

    def per_head(w):            # (dim, inner) -> (heads, dim, dim_head)
        return w.reshape(dim, heads, dim_head).transpose(1, 0, 2)

    wq = per_head(params["wq"] * scale)            # scale folded into Wq
    wk = per_head(params["wkv"][:, :inner])
    wv = per_head(params["wkv"][:, inner:])
    wqkv = jnp.concatenate([wq, wk, wv], axis=0)   # (3*heads, dim, dim_head)
    wout = params["wout"].reshape(heads, dim_head, dim)
    gb = jnp.stack([params["gamma"], params["beta"]], axis=0)                # (2, dim)

    kernel = functools.partial(
        _mca_kernel, heads=heads, dim_head=dim_head,
        use_bias=use_mask,
        use_keep=use_mask and only_attend_immediate_media)

    return pl.pallas_call(
        kernel,
        out_shape=jax.ShapeDtypeStruct((b, n, dim), x.dtype),
        grid_spec=pltpu.PrefetchScalarGridSpec(
            num_scalar_prefetch=0,
            grid=(batch_blocks,),
            in_specs=[
                pl.BlockSpec((bb, n, dim), lambda i: (i, 0, 0)),             # x
                pl.BlockSpec((bb, tm, dim), lambda i: (i, 0, 0)),            # media (flattened)
                pl.BlockSpec((bb, n, tm), lambda i: (i, 0, 0)),              # additive mask bias
                pl.BlockSpec((bb, n, 1), lambda i: (i, 0, 0)),               # row-keep multiplier
                pl.BlockSpec((2, dim), lambda i: (0, 0)),                    # [gamma; beta]
                pl.BlockSpec((3 * heads, dim, dim_head), lambda i: (0, 0, 0)),  # Wq|Wk|Wv per head
                pl.BlockSpec((heads, dim_head, dim), lambda i: (0, 0, 0)),   # Wout per head
            ],
            out_specs=pl.BlockSpec((bb, n, dim), lambda i: (i, 0, 0)),
        ),
        compiler_params=pltpu.CompilerParams(dimension_semantics=("parallel",)),
    )(x, media_flat, bias, keep, gb, wqkv, wout)


# ---------------- pure-JAX reference (mirrors the PyTorch forward) ----------------
def reference(x, media, media_locations, params,
              *, heads=HEADS, dim_head=DIM_HEAD, only_immediate=ONLY_IMMEDIATE):
    b, n, dim = x.shape
    _, t, m, _ = media.shape
    scale = dim_head ** (-0.5)
    mean = jnp.mean(x, -1, keepdims=True)
    var = jnp.mean((x - mean) ** 2, -1, keepdims=True)
    xn = (x - mean) / jnp.sqrt(var + LN_EPS) * params["gamma"] + params["beta"]
    q = xn @ params["wq"]
    media_flat = media.reshape(b, t * m, dim)
    kv = media_flat @ params["wkv"]
    k, v = jnp.split(kv, 2, axis=-1)

    def split_heads(z):
        return z.reshape(z.shape[0], z.shape[1], heads, dim_head).transpose(0, 2, 1, 3)

    q, k, v = split_heads(q) * scale, split_heads(k), split_heads(v)
    sim = jnp.einsum('bhid,bhjd->bhij', q, k)
    if media_locations is not None:
        text_time = jnp.cumsum(media_locations.astype(jnp.int32), -1)        # (b, n)
        media_time = jnp.repeat(jnp.arange(t) + 1, m)                        # (t*m,)
        op = jnp.equal if only_immediate else jnp.greater_equal
        mask = op(text_time[:, None, :, None], media_time[None, None, None, :])
        sim = jnp.where(mask, sim, -jnp.finfo(sim.dtype).max)
    sim = sim - jnp.max(sim, -1, keepdims=True)
    attn = jax.nn.softmax(sim, -1)
    if media_locations is not None and only_immediate:
        no_media = (text_time == 0)[:, None, :, None]
        attn = jnp.where(no_media, 0.0, attn)
    out = jnp.einsum('bhij,bhjd->bhid', attn, v)
    out = out.transpose(0, 2, 1, 3).reshape(b, n, heads * dim_head)
    return out @ params["wout"]


if __name__ == "__main__":
    key = jax.random.PRNGKey(0)
    k_x, k_m, k_loc, k_g, k_b, k_q, k_kv, k_o = jax.random.split(key, 8)

    x = jax.random.normal(k_x, (B, N_TXT, DIM), jnp.float32)
    media = jax.random.normal(k_m, (B, T_MEDIA, M_MEDIA, DIM), jnp.float32)
    media_locations = jax.random.bernoulli(k_loc, 0.3, (B, N_TXT))

    params = {
        "gamma": 1.0 + 0.1 * jax.random.normal(k_g, (DIM,), jnp.float32),
        "beta": 0.05 * jax.random.normal(k_b, (DIM,), jnp.float32),
        # Linear(dim, inner, bias=False): y = x @ W  with W of shape (dim, inner)
        "wq": jax.random.normal(k_q, (DIM, INNER), jnp.float32) * 0.05,
        "wkv": jax.random.normal(k_kv, (DIM, 2 * INNER), jnp.float32) * 0.05,
        "wout": jax.random.normal(k_o, (INNER, DIM), jnp.float32) * 0.05,
    }

    # tolerance 1e-3: softmax denominator uses the EUP approximate reciprocal
    out = jax.block_until_ready(masked_cross_attention(x, media, media_locations, params))
    ref = reference(x, media, media_locations, params)
    np.testing.assert_allclose(np.asarray(out), np.asarray(ref), rtol=1e-3, atol=1e-3)

    # media_locations=None path
    out2 = jax.block_until_ready(masked_cross_attention(x, media, None, params))
    ref2 = reference(x, media, None, params)
    np.testing.assert_allclose(np.asarray(out2), np.asarray(ref2), rtol=1e-3, atol=1e-3)

    # non-immediate (>=) masking path
    out3 = jax.block_until_ready(
        masked_cross_attention(x, media, media_locations, params,
                               only_attend_immediate_media=False))
    ref3 = reference(x, media, media_locations, params, only_immediate=False)
    np.testing.assert_allclose(np.asarray(out3), np.asarray(ref3), rtol=1e-3, atol=1e-3)

    # v7x-style config: 2-step "parallel" grid (one batch element per TensorCore)
    out4 = jax.block_until_ready(
        masked_cross_attention(x, media, media_locations, params, batch_blocks=2))
    np.testing.assert_allclose(np.asarray(out4), np.asarray(ref), rtol=1e-3, atol=1e-3)

    print("KERNEL_OK")
</pallas_src>

<mosaic_0001>
module attributes {stable_mosaic.version = 11 : i64} {
  func.func @_mca_kernel(%arg0: i32, %arg1: memref<2x8x32xf32, #tpu.memory_space<vmem>>, %arg2: memref<2x8x32xf32, #tpu.memory_space<vmem>>, %arg3: memref<2x8x8xf32, #tpu.memory_space<vmem>>, %arg4: memref<2x8x1xf32, #tpu.memory_space<vmem>>, %arg5: memref<2x32xf32, #tpu.memory_space<vmem>>, %arg6: memref<12x32x8xf32, #tpu.memory_space<vmem>>, %arg7: memref<4x8x32xf32, #tpu.memory_space<vmem>>, %arg8: memref<2x8x32xf32, #tpu.memory_space<vmem>>) attributes {dimension_semantics = [#tpu.dimension_semantics<parallel>], iteration_bounds = array<i64: 1>, scalar_prefetch = 0 : i64, scratch_operands = 0 : i64, tpu.core_type = #tpu.core_type<tc>, window_params = [{transform_indices = @transform_0, window_bounds = array<i64: 2, 8, 32>}, {transform_indices = @transform_1, window_bounds = array<i64: 2, 8, 32>}, {transform_indices = @transform_2, window_bounds = array<i64: 2, 8, 8>}, {transform_indices = @transform_3, window_bounds = array<i64: 2, 8, 1>}, {pipeline_mode = #tpu.pipeline_mode<synchronous>, transform_indices = @transform_4, window_bounds = array<i64: 2, 32>}, {pipeline_mode = #tpu.pipeline_mode<synchronous>, transform_indices = @transform_5, window_bounds = array<i64: 12, 32, 8>}, {pipeline_mode = #tpu.pipeline_mode<synchronous>, transform_indices = @transform_6, window_bounds = array<i64: 4, 8, 32>}, {transform_indices = @transform_7, window_bounds = array<i64: 2, 8, 32>}]} {
    %c0 = arith.constant 0 : index
    %c0_0 = arith.constant 0 : index
    %c0_1 = arith.constant 0 : index
    %0 = vector.load %arg1[%c0, %c0_0, %c0_1] : memref<2x8x32xf32, #tpu.memory_space<vmem>>, vector<2x8x32xf32>
    %c0_2 = arith.constant 0 : index
    %c0_3 = arith.constant 0 : index
    %c0_4 = arith.constant 0 : index
    %1 = vector.load %arg2[%c0_2, %c0_3, %c0_4] : memref<2x8x32xf32, #tpu.memory_space<vmem>>, vector<2x8x32xf32>
    %c0_5 = arith.constant 0 : index
    %c0_6 = arith.constant 0 : index
    %2 = vector.load %arg5[%c0_5, %c0_6] : memref<2x32xf32, #tpu.memory_space<vmem>>, vector<2x32xf32>
    %cst = arith.constant dense<0.000000e+00> : vector<2x8xf32>
    %3 = vector.multi_reduction <add>, %0, %cst [2] : vector<2x8x32xf32> to vector<2x8xf32>
    %4 = vector.shape_cast %3 : vector<2x8xf32> to vector<2x8x1xf32>
    %cst_7 = arith.constant 3.200000e+01 : f32
    %5 = vector.broadcast %cst_7 : f32 to vector<2x8x1xf32>
    %6 = arith.divf %4, %5 : vector<2x8x1xf32>
    %7 = vector.broadcast %6 : vector<2x8x1xf32> to vector<2x8x32xf32>
    %8 = arith.subf %0, %7 : vector<2x8x32xf32>
    %9 = arith.mulf %8, %8 : vector<2x8x32xf32>
    %cst_8 = arith.constant dense<0.000000e+00> : vector<2x8xf32>
    %10 = vector.multi_reduction <add>, %9, %cst_8 [2] : vector<2x8x32xf32> to vector<2x8xf32>
    %11 = vector.shape_cast %10 : vector<2x8xf32> to vector<2x8x1xf32>
    %cst_9 = arith.constant 3.200000e+01 : f32
    %12 = vector.broadcast %cst_9 : f32 to vector<2x8x1xf32>
    %13 = arith.divf %11, %12 : vector<2x8x1xf32>
    %14 = vector.broadcast %6 : vector<2x8x1xf32> to vector<2x8x32xf32>
    %15 = arith.subf %0, %14 : vector<2x8x32xf32>
    %cst_10 = arith.constant 9.99999974E-6 : f32
    %16 = vector.broadcast %cst_10 : f32 to vector<2x8x1xf32>
    %17 = arith.addf %13, %16 : vector<2x8x1xf32>
    %18 = math.rsqrt %17 : vector<2x8x1xf32>
    %19 = vector.broadcast %18 : vector<2x8x1xf32> to vector<2x8x32xf32>
    %20 = arith.mulf %15, %19 : vector<2x8x32xf32>
    %21 = vector.extract_strided_slice %2 {offsets = [0, 0], sizes = [1, 32], strides = [1, 1]} : vector<2x32xf32> to vector<1x32xf32>
    %22 = vector.shape_cast %21 : vector<1x32xf32> to vector<1x1x32xf32>
    %23 = vector.broadcast %22 : vector<1x1x32xf32> to vector<2x8x32xf32>
    %24 = arith.mulf %20, %23 : vector<2x8x32xf32>
    %25 = vector.extract_strided_slice %2 {offsets = [1, 0], sizes = [1, 32], strides = [1, 1]} : vector<2x32xf32> to vector<1x32xf32>
    %26 = vector.shape_cast %25 : vector<1x32xf32> to vector<1x1x32xf32>
    %27 = vector.broadcast %26 : vector<1x1x32xf32> to vector<2x8x32xf32>
    %28 = arith.addf %24, %27 : vector<2x8x32xf32>
    %29 = vector.shape_cast %28 : vector<2x8x32xf32> to vector<16x32xf32>
    %30 = vector.shape_cast %1 : vector<2x8x32xf32> to vector<16x32xf32>
    %c0_11 = arith.constant 0 : index
    %c0_12 = arith.constant 0 : index
    %c0_13 = arith.constant 0 : index
    %31 = vector.load %arg3[%c0_11, %c0_12, %c0_13] : memref<2x8x8xf32, #tpu.memory_space<vmem>>, vector<2x8x8xf32>
    %cst_14 = arith.constant 0.000000e+00 : f32
    %32 = vector.broadcast %cst_14 : f32 to vector<16x32xf32>
    %c0_15 = arith.constant 0 : index
    %c0_16 = arith.constant 0 : index
    %c0_17 = arith.constant 0 : index
    %33 = vector.load %arg6[%c0_15, %c0_16, %c0_17] : memref<12x32x8xf32, #tpu.memory_space<vmem>>, vector<1x32x8xf32>
    %34 = vector.shape_cast %33 : vector<1x32x8xf32> to vector<32x8xf32>
    %cst_18 = arith.constant dense<0.000000e+00> : vector<16x8xf32>
    %35 = tpu.matmul %29, %34, %cst_18 {dimension_numbers = #tpu.dot_dimension_numbers<[1], [0], [0], [1], [0, 0, 1, 1], [], []>} : vector<16x32xf32>, vector<32x8xf32>, vector<16x8xf32> -> vector<16x8xf32>
    %c4 = arith.constant 4 : index
    %c0_19 = arith.constant 0 : index
    %c0_20 = arith.constant 0 : index
    %36 = vector.load %arg6[%c4, %c0_19, %c0_20] : memref<12x32x8xf32, #tpu.memory_space<vmem>>, vector<1x32x8xf32>
    %37 = vector.shape_cast %36 : vector<1x32x8xf32> to vector<32x8xf32>
    %cst_21 = arith.constant dense<0.000000e+00> : vector<16x8xf32>
    %38 = tpu.matmul %30, %37, %cst_21 {dimension_numbers = #tpu.dot_dimension_numbers<[1], [0], [0], [1], [0, 0, 1, 1], [], []>} : vector<16x32xf32>, vector<32x8xf32>, vector<16x8xf32> -> vector<16x8xf32>
    %c8 = arith.constant 8 : index
    %c0_22 = arith.constant 0 : index
    %c0_23 = arith.constant 0 : index
    %39 = vector.load %arg6[%c8, %c0_22, %c0_23] : memref<12x32x8xf32, #tpu.memory_space<vmem>>, vector<1x32x8xf32>
    %40 = vector.shape_cast %39 : vector<1x32x8xf32> to vector<32x8xf32>
    %cst_24 = arith.constant dense<0.000000e+00> : vector<16x8xf32>
    %41 = tpu.matmul %30, %40, %cst_24 {dimension_numbers = #tpu.dot_dimension_numbers<[1], [0], [0], [1], [0, 0, 1, 1], [], []>} : vector<16x32xf32>, vector<32x8xf32>, vector<16x8xf32> -> vector<16x8xf32>
    %42 = vector.shape_cast %35 : vector<16x8xf32> to vector<2x8x8xf32>
    %43 = vector.shape_cast %38 : vector<16x8xf32> to vector<2x8x8xf32>
    %44 = vector.shape_cast %41 : vector<16x8xf32> to vector<2x8x8xf32>
    "tpu.trace_start"() <{level = 10 : i32, message = "bnd,bmd->bnm"}> : () -> ()
    %cst_25 = arith.constant dense<0.000000e+00> : vector<2x8x8xf32>
    %45 = tpu.matmul %42, %43, %cst_25 {dimension_numbers = #tpu.dot_dimension_numbers<[2], [2], [1], [1], [0, 0, 0, 1, 1, 1], [0], [0]>} : vector<2x8x8xf32>, vector<2x8x8xf32>, vector<2x8x8xf32> -> vector<2x8x8xf32>
    "tpu.trace_stop"() : () -> ()
    %46 = arith.addf %45, %31 : vector<2x8x8xf32>
    %cst_26 = arith.constant dense<0xFF800000> : vector<2x8xf32>
    %47 = vector.multi_reduction <maximumf>, %46, %cst_26 [2] : vector<2x8x8xf32> to vector<2x8xf32>
    %48 = vector.shape_cast %47 : vector<2x8xf32> to vector<2x8x1xf32>
    %49 = vector.broadcast %48 : vector<2x8x1xf32> to vector<2x8x8xf32>
    %50 = arith.subf %46, %49 : vector<2x8x8xf32>
    %51 = math.exp %50 : vector<2x8x8xf32>
    %cst_27 = arith.constant dense<0.000000e+00> : vector<2x8xf32>
    %52 = vector.multi_reduction <add>, %51, %cst_27 [2] : vector<2x8x8xf32> to vector<2x8xf32>
    %53 = vector.shape_cast %52 : vector<2x8xf32> to vector<2x8x1xf32>
    %54 = tpu.reciprocal %53 {approx = true} : vector<2x8x1xf32> -> vector<2x8x1xf32>
    %55 = vector.broadcast %54 : vector<2x8x1xf32> to vector<2x8x8xf32>
    %56 = arith.mulf %51, %55 : vector<2x8x8xf32>
    "tpu.trace_start"() <{level = 10 : i32, message = "bnm,bmd->bnd"}> : () -> ()
    %cst_28 = arith.constant dense<0.000000e+00> : vector<2x8x8xf32>
    %57 = tpu.matmul %56, %44, %cst_28 {dimension_numbers = #tpu.dot_dimension_numbers<[2], [1], [1], [2], [0, 0, 0, 1, 1, 2], [0], [0]>} : vector<2x8x8xf32>, vector<2x8x8xf32>, vector<2x8x8xf32> -> vector<2x8x8xf32>
    "tpu.trace_stop"() : () -> ()
    %58 = vector.shape_cast %57 : vector<2x8x8xf32> to vector<16x8xf32>
    %c0_29 = arith.constant 0 : index
    %c0_30 = arith.constant 0 : index
    %c0_31 = arith.constant 0 : index
    %59 = vector.load %arg7[%c0_29, %c0_30, %c0_31] : memref<4x8x32xf32, #tpu.memory_space<vmem>>, vector<1x8x32xf32>
    %60 = vector.shape_cast %59 : vector<1x8x32xf32> to vector<8x32xf32>
    %cst_32 = arith.constant dense<0.000000e+00> : vector<16x32xf32>
    %61 = tpu.matmul %58, %60, %cst_32 {dimension_numbers = #tpu.dot_dimension_numbers<[1], [0], [0], [1], [0, 0, 1, 1], [], []>} : vector<16x8xf32>, vector<8x32xf32>, vector<16x32xf32> -> vector<16x32xf32>
    %62 = arith.addf %32, %61 : vector<16x32xf32>
    %c1 = arith.constant 1 : index
    %c0_33 = arith.constant 0 : index
    %c0_34 = arith.constant 0 : index
    %63 = vector.load %arg6[%c1, %c0_33, %c0_34] : memref<12x32x8xf32, #tpu.memory_space<vmem>>, vector<1x32x8xf32>
    %64 = vector.shape_cast %63 : vector<1x32x8xf32> to vector<32x8xf32>
    %cst_35 = arith.constant dense<0.000000e+00> : vector<16x8xf32>
    %65 = tpu.matmul %29, %64, %cst_35 {dimension_numbers = #tpu.dot_dimension_numbers<[1], [0], [0], [1], [0, 0, 1, 1], [], []>} : vector<16x32xf32>, vector<32x8xf32>, vector<16x8xf32> -> vector<16x8xf32>
    %c5 = arith.constant 5 : index
    %c0_36 = arith.constant 0 : index
    %c0_37 = arith.constant 0 : index
    %66 = vector.load %arg6[%c5, %c0_36, %c0_37] : memref<12x32x8xf32, #tpu.memory_space<vmem>>, vector<1x32x8xf32>
    %67 = vector.shape_cast %66 : vector<1x32x8xf32> to vector<32x8xf32>
    %cst_38 = arith.constant dense<0.000000e+00> : vector<16x8xf32>
    %68 = tpu.matmul %30, %67, %cst_38 {dimension_numbers = #tpu.dot_dimension_numbers<[1], [0], [0], [1], [0, 0, 1, 1], [], []>} : vector<16x32xf32>, vector<32x8xf32>, vector<16x8xf32> -> vector<16x8xf32>
    %c9 = arith.constant 9 : index
    %c0_39 = arith.constant 0 : index
    %c0_40 = arith.constant 0 : index
    %69 = vector.load %arg6[%c9, %c0_39, %c0_40] : memref<12x32x8xf32, #tpu.memory_space<vmem>>, vector<1x32x8xf32>
    %70 = vector.shape_cast %69 : vector<1x32x8xf32> to vector<32x8xf32>
    %cst_41 = arith.constant dense<0.000000e+00> : vector<16x8xf32>
    %71 = tpu.matmul %30, %70, %cst_41 {dimension_numbers = #tpu.dot_dimension_numbers<[1], [0], [0], [1], [0, 0, 1, 1], [], []>} : vector<16x32xf32>, vector<32x8xf32>, vector<16x8xf32> -> vector<16x8xf32>
    %72 = vector.shape_cast %65 : vector<16x8xf32> to vector<2x8x8xf32>
    %73 = vector.shape_cast %68 : vector<16x8xf32> to vector<2x8x8xf32>
    %74 = vector.shape_cast %71 : vector<16x8xf32> to vector<2x8x8xf32>
    "tpu.trace_start"() <{level = 10 : i32, message = "bnd,bmd->bnm"}> : () -> ()
    %cst_42 = arith.constant dense<0.000000e+00> : vector<2x8x8xf32>
    %75 = tpu.matmul %72, %73, %cst_42 {dimension_numbers = #tpu.dot_dimension_numbers<[2], [2], [1], [1], [0, 0, 0, 1, 1, 1], [0], [0]>} : vector<2x8x8xf32>, vector<2x8x8xf32>, vector<2x8x8xf32> -> vector<2x8x8xf32>
    "tpu.trace_stop"() : () -> ()
    %76 = arith.addf %75, %31 : vector<2x8x8xf32>
    %cst_43 = arith.constant dense<0xFF800000> : vector<2x8xf32>
    %77 = vector.multi_reduction <maximumf>, %76, %cst_43 [2] : vector<2x8x8xf32> to vector<2x8xf32>
    %78 = vector.shape_cast %77 : vector<2x8xf32> to vector<2x8x1xf32>
    %79 = vector.broadcast %78 : vector<2x8x1xf32> to vector<2x8x8xf32>
    %80 = arith.subf %76, %79 : vector<2x8x8xf32>
    %81 = math.exp %80 : vector<2x8x8xf32>
    %cst_44 = arith.constant dense<0.000000e+00> : vector<2x8xf32>
    %82 = vector.multi_reduction <add>, %81, %cst_44 [2] : vector<2x8x8xf32> to vector<2x8xf32>
    %83 = vector.shape_cast %82 : vector<2x8xf32> to vector<2x8x1xf32>
    %84 = tpu.reciprocal %83 {approx = true} : vector<2x8x1xf32> -> vector<2x8x1xf32>
    %85 = vector.broadcast %84 : vector<2x8x1xf32> to vector<2x8x8xf32>
    %86 = arith.mulf %81, %85 : vector<2x8x8xf32>
    "tpu.trace_start"() <{level = 10 : i32, message = "bnm,bmd->bnd"}> : () -> ()
    %cst_45 = arith.constant dense<0.000000e+00> : vector<2x8x8xf32>
    %87 = tpu.matmul %86, %74, %cst_45 {dimension_numbers = #tpu.dot_dimension_numbers<[2], [1], [1], [2], [0, 0, 0, 1, 1, 2], [0], [0]>} : vector<2x8x8xf32>, vector<2x8x8xf32>, vector<2x8x8xf32> -> vector<2x8x8xf32>
    "tpu.trace_stop"() : () -> ()
    %88 = vector.shape_cast %87 : vector<2x8x8xf32> to vector<16x8xf32>
    %c1_46 = arith.constant 1 : index
    %c0_47 = arith.constant 0 : index
    %c0_48 = arith.constant 0 : index
    %89 = vector.load %arg7[%c1_46, %c0_47, %c0_48] : memref<4x8x32xf32, #tpu.memory_space<vmem>>, vector<1x8x32xf32>
    %90 = vector.shape_cast %89 : vector<1x8x32xf32> to vector<8x32xf32>
    %cst_49 = arith.constant dense<0.000000e+00> : vector<16x32xf32>
    %91 = tpu.matmul %88, %90, %cst_49 {dimension_numbers = #tpu.dot_dimension_numbers<[1], [0], [0], [1], [0, 0, 1, 1], [], []>} : vector<16x8xf32>, vector<8x32xf32>, vector<16x32xf32> -> vector<16x32xf32>
    %92 = arith.addf %62, %91 : vector<16x32xf32>
    %c2 = arith.constant 2 : index
    %c0_50 = arith.constant 0 : index
    %c0_51 = arith.constant 0 : index
    %93 = vector.load %arg6[%c2, %c0_50, %c0_51] : memref<12x32x8xf32, #tpu.memory_space<vmem>>, vector<1x32x8xf32>
    %94 = vector.shape_cast %93 : vector<1x32x8xf32> to vector<32x8xf32>
    %cst_52 = arith.constant dense<0.000000e+00> : vector<16x8xf32>
    %95 = tpu.matmul %29, %94, %cst_52 {dimension_numbers = #tpu.dot_dimension_numbers<[1], [0], [0], [1], [0, 0, 1, 1], [], []>} : vector<16x32xf32>, vector<32x8xf32>, vector<16x8xf32> -> vector<16x8xf32>
    %c6 = arith.constant 6 : index
    %c0_53 = arith.constant 0 : index
    %c0_54 = arith.constant 0 : index
    %96 = vector.load %arg6[%c6, %c0_53, %c0_54] : memref<12x32x8xf32, #tpu.memory_space<vmem>>, vector<1x32x8xf32>
    %97 = vector.shape_cast %96 : vector<1x32x8xf32> to vector<32x8xf32>
    %cst_55 = arith.constant dense<0.000000e+00> : vector<16x8xf32>
    %98 = tpu.matmul %30, %97, %cst_55 {dimension_numbers = #tpu.dot_dimension_numbers<[1], [0], [0], [1], [0, 0, 1, 1], [], []>} : vector<16x32xf32>, vector<32x8xf32>, vector<16x8xf32> -> vector<16x8xf32>
    %c10 = arith.constant 10 : index
    %c0_56 = arith.constant 0 : index
    %c0_57 = arith.constant 0 : index
    %99 = vector.load %arg6[%c10, %c0_56, %c0_57] : memref<12x32x8xf32, #tpu.memory_space<vmem>>, vector<1x32x8xf32>
    %100 = vector.shape_cast %99 : vector<1x32x8xf32> to vector<32x8xf32>
    %cst_58 = arith.constant dense<0.000000e+00> : vector<16x8xf32>
    %101 = tpu.matmul %30, %100, %cst_58 {dimension_numbers = #tpu.dot_dimension_numbers<[1], [0], [0], [1], [0, 0, 1, 1], [], []>} : vector<16x32xf32>, vector<32x8xf32>, vector<16x8xf32> -> vector<16x8xf32>
    %102 = vector.shape_cast %95 : vector<16x8xf32> to vector<2x8x8xf32>
    %103 = vector.shape_cast %98 : vector<16x8xf32> to vector<2x8x8xf32>
    %104 = vector.shape_cast %101 : vector<16x8xf32> to vector<2x8x8xf32>
    "tpu.trace_start"() <{level = 10 : i32, message = "bnd,bmd->bnm"}> : () -> ()
    %cst_59 = arith.constant dense<0.000000e+00> : vector<2x8x8xf32>
    %105 = tpu.matmul %102, %103, %cst_59 {dimension_numbers = #tpu.dot_dimension_numbers<[2], [2], [1], [1], [0, 0, 0, 1, 1, 1], [0], [0]>} : vector<2x8x8xf32>, vector<2x8x8xf32>, vector<2x8x8xf32> -> vector<2x8x8xf32>
    "tpu.trace_stop"() : () -> ()
    %106 = arith.addf %105, %31 : vector<2x8x8xf32>
    %cst_60 = arith.constant dense<0xFF800000> : vector<2x8xf32>
    %107 = vector.multi_reduction <maximumf>, %106, %cst_60 [2] : vector<2x8x8xf32> to vector<2x8xf32>
    %108 = vector.shape_cast %107 : vector<2x8xf32> to vector<2x8x1xf32>
    %109 = vector.broadcast %108 : vector<2x8x1xf32> to vector<2x8x8xf32>
    %110 = arith.subf %106, %109 : vector<2x8x8xf32>
    %111 = math.exp %110 : vector<2x8x8xf32>
    %cst_61 = arith.constant dense<0.000000e+00> : vector<2x8xf32>
    %112 = vector.multi_reduction <add>, %111, %cst_61 [2] : vector<2x8x8xf32> to vector<2x8xf32>
    %113 = vector.shape_cast %112 : vector<2x8xf32> to vector<2x8x1xf32>
    %114 = tpu.reciprocal %113 {approx = true} : vector<2x8x1xf32> -> vector<2x8x1xf32>
    %115 = vector.broadcast %114 : vector<2x8x1xf32> to vector<2x8x8xf32>
    %116 = arith.mulf %111, %115 : vector<2x8x8xf32>
    "tpu.trace_start"() <{level = 10 : i32, message = "bnm,bmd->bnd"}> : () -> ()
    %cst_62 = arith.constant dense<0.000000e+00> : vector<2x8x8xf32>
    %117 = tpu.matmul %116, %104, %cst_62 {dimension_numbers = #tpu.dot_dimension_numbers<[2], [1], [1], [2], [0, 0, 0, 1, 1, 2], [0], [0]>} : vector<2x8x8xf32>, vector<2x8x8xf32>, vector<2x8x8xf32> -> vector<2x8x8xf32>
    "tpu.trace_stop"() : () -> ()
    %118 = vector.shape_cast %117 : vector<2x8x8xf32> to vector<16x8xf32>
    %c2_63 = arith.constant 2 : index
    %c0_64 = arith.constant 0 : index
    %c0_65 = arith.constant 0 : index
    %119 = vector.load %arg7[%c2_63, %c0_64, %c0_65] : memref<4x8x32xf32, #tpu.memory_space<vmem>>, vector<1x8x32xf32>
    %120 = vector.shape_cast %119 : vector<1x8x32xf32> to vector<8x32xf32>
    %cst_66 = arith.constant dense<0.000000e+00> : vector<16x32xf32>
    %121 = tpu.matmul %118, %120, %cst_66 {dimension_numbers = #tpu.dot_dimension_numbers<[1], [0], [0], [1], [0, 0, 1, 1], [], []>} : vector<16x8xf32>, vector<8x32xf32>, vector<16x32xf32> -> vector<16x32xf32>
    %122 = arith.addf %92, %121 : vector<16x32xf32>
    %c3 = arith.constant 3 : index
    %c0_67 = arith.constant 0 : index
    %c0_68 = arith.constant 0 : index
    %123 = vector.load %arg6[%c3, %c0_67, %c0_68] : memref<12x32x8xf32, #tpu.memory_space<vmem>>, vector<1x32x8xf32>
    %124 = vector.shape_cast %123 : vector<1x32x8xf32> to vector<32x8xf32>
    %cst_69 = arith.constant dense<0.000000e+00> : vector<16x8xf32>
    %125 = tpu.matmul %29, %124, %cst_69 {dimension_numbers = #tpu.dot_dimension_numbers<[1], [0], [0], [1], [0, 0, 1, 1], [], []>} : vector<16x32xf32>, vector<32x8xf32>, vector<16x8xf32> -> vector<16x8xf32>
    %c7 = arith.constant 7 : index
    %c0_70 = arith.constant 0 : index
    %c0_71 = arith.constant 0 : index
    %126 = vector.load %arg6[%c7, %c0_70, %c0_71] : memref<12x32x8xf32, #tpu.memory_space<vmem>>, vector<1x32x8xf32>
    %127 = vector.shape_cast %126 : vector<1x32x8xf32> to vector<32x8xf32>
    %cst_72 = arith.constant dense<0.000000e+00> : vector<16x8xf32>
    %128 = tpu.matmul %30, %127, %cst_72 {dimension_numbers = #tpu.dot_dimension_numbers<[1], [0], [0], [1], [0, 0, 1, 1], [], []>} : vector<16x32xf32>, vector<32x8xf32>, vector<16x8xf32> -> vector<16x8xf32>
    %c11 = arith.constant 11 : index
    %c0_73 = arith.constant 0 : index
    %c0_74 = arith.constant 0 : index
    %129 = vector.load %arg6[%c11, %c0_73, %c0_74] : memref<12x32x8xf32, #tpu.memory_space<vmem>>, vector<1x32x8xf32>
    %130 = vector.shape_cast %129 : vector<1x32x8xf32> to vector<32x8xf32>
    %cst_75 = arith.constant dense<0.000000e+00> : vector<16x8xf32>
    %131 = tpu.matmul %30, %130, %cst_75 {dimension_numbers = #tpu.dot_dimension_numbers<[1], [0], [0], [1], [0, 0, 1, 1], [], []>} : vector<16x32xf32>, vector<32x8xf32>, vector<16x8xf32> -> vector<16x8xf32>
    %132 = vector.shape_cast %125 : vector<16x8xf32> to vector<2x8x8xf32>
    %133 = vector.shape_cast %128 : vector<16x8xf32> to vector<2x8x8xf32>
    %134 = vector.shape_cast %131 : vector<16x8xf32> to vector<2x8x8xf32>
    "tpu.trace_start"() <{level = 10 : i32, message = "bnd,bmd->bnm"}> : () -> ()
    %cst_76 = arith.constant dense<0.000000e+00> : vector<2x8x8xf32>
    %135 = tpu.matmul %132, %133, %cst_76 {dimension_numbers = #tpu.dot_dimension_numbers<[2], [2], [1], [1], [0, 0, 0, 1, 1, 1], [0], [0]>} : vector<2x8x8xf32>, vector<2x8x8xf32>, vector<2x8x8xf32> -> vector<2x8x8xf32>
    "tpu.trace_stop"() : () -> ()
    %136 = arith.addf %135, %31 : vector<2x8x8xf32>
    %cst_77 = arith.constant dense<0xFF800000> : vector<2x8xf32>
    %137 = vector.multi_reduction <maximumf>, %136, %cst_77 [2] : vector<2x8x8xf32> to vector<2x8xf32>
    %138 = vector.shape_cast %137 : vector<2x8xf32> to vector<2x8x1xf32>
    %139 = vector.broadcast %138 : vector<2x8x1xf32> to vector<2x8x8xf32>
    %140 = arith.subf %136, %139 : vector<2x8x8xf32>
    %141 = math.exp %140 : vector<2x8x8xf32>
    %cst_78 = arith.constant dense<0.000000e+00> : vector<2x8xf32>
    %142 = vector.multi_reduction <add>, %141, %cst_78 [2] : vector<2x8x8xf32> to vector<2x8xf32>
    %143 = vector.shape_cast %142 : vector<2x8xf32> to vector<2x8x1xf32>
    %144 = tpu.reciprocal %143 {approx = true} : vector<2x8x1xf32> -> vector<2x8x1xf32>
    %145 = vector.broadcast %144 : vector<2x8x1xf32> to vector<2x8x8xf32>
    %146 = arith.mulf %141, %145 : vector<2x8x8xf32>
    "tpu.trace_start"() <{level = 10 : i32, message = "bnm,bmd->bnd"}> : () -> ()
    %cst_79 = arith.constant dense<0.000000e+00> : vector<2x8x8xf32>
    %147 = tpu.matmul %146, %134, %cst_79 {dimension_numbers = #tpu.dot_dimension_numbers<[2], [1], [1], [2], [0, 0, 0, 1, 1, 2], [0], [0]>} : vector<2x8x8xf32>, vector<2x8x8xf32>, vector<2x8x8xf32> -> vector<2x8x8xf32>
    "tpu.trace_stop"() : () -> ()
    %148 = vector.shape_cast %147 : vector<2x8x8xf32> to vector<16x8xf32>
    %c3_80 = arith.constant 3 : index
    %c0_81 = arith.constant 0 : index
    %c0_82 = arith.constant 0 : index
    %149 = vector.load %arg7[%c3_80, %c0_81, %c0_82] : memref<4x8x32xf32, #tpu.memory_space<vmem>>, vector<1x8x32xf32>
    %150 = vector.shape_cast %149 : vector<1x8x32xf32> to vector<8x32xf32>
    %cst_83 = arith.constant dense<0.000000e+00> : vector<16x32xf32>
    %151 = tpu.matmul %148, %150, %cst_83 {dimension_numbers = #tpu.dot_dimension_numbers<[1], [0], [0], [1], [0, 0, 1, 1], [], []>} : vector<16x8xf32>, vector<8x32xf32>, vector<16x32xf32> -> vector<16x32xf32>
    %152 = arith.addf %122, %151 : vector<16x32xf32>
    %153 = vector.shape_cast %152 : vector<16x32xf32> to vector<2x8x32xf32>
    %c0_84 = arith.constant 0 : index
    %c0_85 = arith.constant 0 : index
    %c0_86 = arith.constant 0 : index
    %154 = vector.load %arg4[%c0_84, %c0_85, %c0_86] : memref<2x8x1xf32, #tpu.memory_space<vmem>>, vector<2x8x1xf32>
    %155 = vector.broadcast %154 : vector<2x8x1xf32> to vector<2x8x32xf32>
    %156 = arith.mulf %153, %155 : vector<2x8x32xf32>
    %c0_87 = arith.constant 0 : index
    %c0_88 = arith.constant 0 : index
    %c0_89 = arith.constant 0 : index
    %157 = vector.load %arg8[%c0_87, %c0_88, %c0_89] : memref<2x8x32xf32, #tpu.memory_space<vmem>>, vector<2x8x32xf32>
    tpu.vector_store %arg8[%c0_87, %c0_88, %c0_89], %156 {strides = array<i32>} : memref<2x8x32xf32, #tpu.memory_space<vmem>>, vector<2x8x32xf32>,
    return
  }
  func.func @transform_0(%arg0: i32) -> (i32, i32, i32) {
    %c0_i32 = arith.constant 0 : i32
    %c0_i32_0 = arith.constant 0 : i32
    %c0_i32_1 = arith.constant 0 : i32
    return %arg0, %c0_i32, %c0_i32_0 : i32, i32, i32
  }
  func.func @transform_1(%arg0: i32) -> (i32, i32, i32) {
    %c0_i32 = arith.constant 0 : i32
    %c0_i32_0 = arith.constant 0 : i32
    %c0_i32_1 = arith.constant 0 : i32
    return %arg0, %c0_i32, %c0_i32_0 : i32, i32, i32
  }
  func.func @transform_2(%arg0: i32) -> (i32, i32, i32) {
    %c0_i32 = arith.constant 0 : i32
    %c0_i32_0 = arith.constant 0 : i32
    %c0_i32_1 = arith.constant 0 : i32
    return %arg0, %c0_i32, %c0_i32_0 : i32, i32, i32
  }
  func.func @transform_3(%arg0: i32) -> (i32, i32, i32) {
    %c0_i32 = arith.constant 0 : i32
    %c0_i32_0 = arith.constant 0 : i32
    %c0_i32_1 = arith.constant 0 : i32
    return %arg0, %c0_i32, %c0_i32_0 : i32, i32, i32
  }
  func.func @transform_4(%arg0: i32) -> (i32, i32) {
    %c0_i32 = arith.constant 0 : i32
    %c0_i32_0 = arith.constant 0 : i32
    %c0_i32_1 = arith.constant 0 : i32
    return %c0_i32, %c0_i32_0 : i32, i32
  }
  func.func @transform_5(%arg0: i32) -> (i32, i32, i32) {
    %c0_i32 = arith.constant 0 : i32
    %c0_i32_0 = arith.constant 0 : i32
    %c0_i32_1 = arith.constant 0 : i32
    %c0_i32_2 = arith.constant 0 : i32
    return %c0_i32, %c0_i32_0, %c0_i32_1 : i32, i32, i32
  }
  func.func @transform_6(%arg0: i32) -> (i32, i32, i32) {
    %c0_i32 = arith.constant 0 : i32
    %c0_i32_0 = arith.constant 0 : i32
    %c0_i32_1 = arith.constant 0 : i32
    %c0_i32_2 = arith.constant 0 : i32
    return %c0_i32, %c0_i32_0, %c0_i32_1 : i32, i32, i32
  }
  func.func @transform_7(%arg0: i32) -> (i32, i32, i32) {
    %c0_i32 = arith.constant 0 : i32
    %c0_i32_0 = arith.constant 0 : i32
    %c0_i32_1 = arith.constant 0 : i32
    return %arg0, %c0_i32, %c0_i32_0 : i32, i32, i32
  }
}

</mosaic_0001>

<llo_original>
// kernel: tpu_custom_call.1
$region0: #{tpu_custom_call.1}
  #allocation0 [shape = 'u32[]', space=smem, size = 0x4, offset = 0x4, fixed_abs, tag = 'smem constant byte address 0x4 - core index']
  #allocation1 [shape = 'u32[72,128]{1,0:T(1,128)}', space=vmem, size = 0x9000, scoped, tag = 'internal scratch']
  %s0 = inlined_call_operand.vmem [shape: f32[2,8,32], index: 0, kind: input, shape index: {}]
  %s1 = inlined_call_operand.vmem [shape: f32[2,8,32], index: 1, kind: input, shape index: {}]
  %s2 = inlined_call_operand.vmem [shape: f32[2,8,8], index: 2, kind: input, shape index: {}]
  %s3 = inlined_call_operand.vmem [shape: f32[2,8,1], index: 3, kind: input, shape index: {}]
  %s4 = inlined_call_operand.vmem [shape: f32[2,32], index: 4, kind: input, shape index: {}]
  %s5 = inlined_call_operand.vmem [shape: f32[12,32,8], index: 5, kind: input, shape index: {}]
  %s6 = inlined_call_operand.vmem [shape: f32[4,8,32], index: 6, kind: input, shape index: {}]
  %s7 = inlined_call_operand.hbm [shape: f32[2,8,32], index: 7, kind: output, shape index: {}]
  %s8 = sld [smem:[#allocation0]]
  $region38: #{tpu_custom_call.1} parent=0
    _
  %s10 = ssub.s32 1, %s8
  %s11 = scalar_select 0, %s10, %s8
  $region1: #{tpu_custom_call.1} parent=0
    #allocation2 [shape = 'u8[8192]{0}', space=vmem, size = 0x2000, scoped, tag = 'output window, operand 0, single buffered']
    #allocation3 [shape = 's32[1]{0}', space=sflag, size = 0x4, scoped, tag = 'scoped memory for tpu_custom_call.1']
    %12 = vsyncpa [#allocation3], 0
    // Predicated region
    $region2: #{tpu_custom_call.1} parent=1 // pred_check
      _
    $region3: #{tpu_custom_call.1} parent=1 // pred_check_branch
      %14 = sbr.rel (0) target = $region5
    $region4: #{tpu_custom_call.1} parent=1 // pred_region
      _
    $region5: #{tpu_custom_call.1} parent=1 // pred_fallthru
      _
    // Predicated region
    $region6: #{tpu_custom_call.1} parent=1 // pred_check
      _
    $region7: #{tpu_custom_call.1} parent=1 // pred_check_branch
      %16 = sbr.rel (0) target = $region9
    $region8: #{tpu_custom_call.1} parent=1 // pred_region
      _
    $region9: #{tpu_custom_call.1} parent=1 // pred_fallthru
      _
    // Predicated region
    $region10: #{tpu_custom_call.1} parent=1 // pred_check
      _
    $region11: #{tpu_custom_call.1} parent=1 // pred_check_branch
      %18 = sbr.rel (0) target = $region13
    $region12: #{tpu_custom_call.1} parent=1 // pred_region
      _
    $region13: #{tpu_custom_call.1} parent=1 // pred_fallthru
      _
    // Predicated region
    $region14: #{tpu_custom_call.1} parent=1 // pred_check
      _
    $region15: #{tpu_custom_call.1} parent=1 // pred_check_branch
      %20 = sbr.rel (0) target = $region17
    $region16: #{tpu_custom_call.1} parent=1 // pred_region
      _
    $region17: #{tpu_custom_call.1} parent=1 // pred_fallthru
      _
    // Predicated region
    $region18: #{tpu_custom_call.1} parent=1 // pred_check
      _
    $region19: #{tpu_custom_call.1} parent=1 // pred_check_branch
      %22 = sbr.rel (0) target = $region21
    $region20: #{tpu_custom_call.1} parent=1 // pred_region
      _
    $region21: #{tpu_custom_call.1} parent=1 // pred_fallthru
      _
    // Predicated region
    $region22: #{tpu_custom_call.1} parent=1 // pred_check
      _
    $region23: #{tpu_custom_call.1} parent=1 // pred_check_branch
      %24 = sbr.rel (0) target = $region25
    $region24: #{tpu_custom_call.1} parent=1 // pred_region
      _
    $region25: #{tpu_custom_call.1} parent=1 // pred_fallthru
      _
    // Predicated region
    $region26: #{tpu_custom_call.1} parent=1 // pred_check
      _
    $region27: #{tpu_custom_call.1} parent=1 // pred_check_branch
      %26 = sbr.rel (0) target = $region29
    $region28: #{tpu_custom_call.1} parent=1 // pred_region
      _
    $region29: #{tpu_custom_call.1} parent=1 // pred_fallthru
      _
    %v27 = vld [vmem:[%s0] sm:$0xff]
    %v28 = vld [vmem:[%s0 + $0x8] sm:$0xff]
    %v29 = vld [vmem:[%s1] sm:$0xff]
    %v30 = vld [vmem:[%s1 + $0x8] sm:$0xff]
    %v31 = vld [vmem:[%s4] sm:$0x3]
    %vm32 = vcmask 261120
    %v33 = vsel %vm32, %v27, 0.0
    %34 = vadd.xlane.f32.xlu0 %v33
    %v35 = vpop.xlane.xlu0 %34
    %v36 = vsel %vm32, %v28, 0.0
    %37 = vadd.xlane.f32.xlu0 %v36
    %v38 = vpop.xlane.xlu0 %37
    %v39 = vrcp.pop 32.0
    %v40 = vmul.f32 32.0, %v39
    %v41 = vsub.f32 1.0, %v40
    %v42 = vmul.f32 %v39, %v41
    %v43 = vadd.f32 %v39, %v42
    %vm44 = vweird.f32 %v39
    %v45 = vsel %vm44, %v39, %v43
    %v46 = vmul.f32 %v35, %v45
    %v47 = vmul.f32 %v38, %v45
    %v48 = vsub.f32 %v27, %v46
    %v49 = vsub.f32 %v28, %v47
    %v50 = vmul.f32 %v48, %v48
    %v51 = vmul.f32 %v49, %v49
    %v52 = vsel %vm32, %v50, 0.0
    %53 = vadd.xlane.f32.xlu0 %v52
    %v54 = vpop.xlane.xlu0 %53
    %v55 = vsel %vm32, %v51, 0.0
    %56 = vadd.xlane.f32.xlu0 %v55
    %v57 = vpop.xlane.xlu0 %56
    %v58 = vmul.f32 %v54, %v45
    %v59 = vmul.f32 %v57, %v45
    %v60 = vadd.f32 %v58, 1e-05
    %v61 = vadd.f32 %v59, 1e-05
    %v62 = vrsqrt.pop %v60
    %v63 = vmul.f32 %v62, %v60
    %v64 = vmul.f32 %v63, %v62
    %v65 = vmul.f32 0.5, %v64
    %v66 = vsub.f32 1.5, %v65
    %v67 = vmul.f32 %v62, %v66
    %vm68 = vweird.f32 %v60
    %vm69 = vweird.f32 %v62
    %vm70 = vmor %vm68, %vm69
    %v71 = vsel %vm70, %v62, %v67
    %v72 = vrsqrt.pop %v61
    %v73 = vmul.f32 %v72, %v61
    %v74 = vmul.f32 %v73, %v72
    %v75 = vmul.f32 0.5, %v74
    %v76 = vsub.f32 1.5, %v75
    %v77 = vmul.f32 %v72, %v76
    %vm78 = vweird.f32 %v61
    %vm79 = vweird.f32 %v72
    %vm80 = vmor %vm78, %vm79
    %v81 = vsel %vm80, %v72, %v77
    %v82 = vmul.f32 %v48, %v71
    %v83 = vmul.f32 %v49, %v81
    %v84 = vperm.slane %v31, 0
    %v85 = vmul.f32 %v82, %v84
    %v86 = vmul.f32 %v83, %v84
    %v87 = vperm.slane %v31, 1
    %v88 = vadd.f32 %v85, %v87
    %v89 = vadd.f32 %v86, %v87
    %v90 = vld [vmem:[%s2] sm:$0xff]
    %v91 = vld [vmem:[%s2 + $0x8] sm:$0xff]
    %v92 = vld [vmem:[%s5] sm:$0xff]
    %v93 = vld [vmem:[%s5 + $0x8] sm:$0xff]
    %v94 = vld [vmem:[%s5 + $0x10] sm:$0xff]
    %v95 = vld [vmem:[%s5 + $0x18] sm:$0xff]
    %v97 = vsel %vm32, %v88, 0
    %v100 = vsel %vm32, %v89, 0
    %102 = vmatpush.msra.mxu0 0.0
    %103 = vmatpush.msra.mxu0 0.0
    %104 = vmatpush.msra.mxu0 0.0
    %105 = vmatpush.msra.mxu0 0.0
    %106 = vmatpush.msra.mxu0 0.0
    %107 = vmatpush.msra.mxu0 0.0
    %108 = vmatpush.msra.mxu0 0.0
    %109 = vmatpush.msra.mxu0 0.0
    %110 = vmatpush.msra.mxu0 0.0
    %111 = vmatpush.msra.mxu0 0.0
    %112 = vmatpush.msra.mxu0 0.0
    %113 = vmatpush.msra.mxu0 0.0
    %114 = vmatpush.msra.mxu0 %v95
    %115 = vmatpush.msra.mxu0 %v94
    %116 = vmatpush.msra.mxu0 %v93
    %117 = vmatpush.msra.mxu0 %v92
    %118 = vmatmul.f32.gmra.mxu0 %v97
    %v119 = vpop.f32.mrf.mxu0
    %v120 = vadd.f32 0.0, %v119
    %121 = vmatmul.f32.gmra.mxu0 %v100
    %v122 = vpop.f32.mrf.mxu0
    %v123 = vadd.f32 0.0, %v122
    %124 = vdwg.mxu0
    %s125 = scalar_lea.vmem %s5, 128
    %v126 = vld [vmem:[%s125] sm:$0xff]
    %v127 = vld [vmem:[%s125 + $0x8] sm:$0xff]
    %v128 = vld [vmem:[%s125 + $0x10] sm:$0xff]
    %v129 = vld [vmem:[%s125 + $0x18] sm:$0xff]
    %v131 = vsel %vm32, %v29, 0
    %v134 = vsel %vm32, %v30, 0
    %136 = vmatpush.msra.mxu0 0.0
    %137 = vmatpush.msra.mxu0 0.0
    %138 = vmatpush.msra.mxu0 0.0
    %139 = vmatpush.msra.mxu0 0.0
    %140 = vmatpush.msra.mxu0 0.0
    %141 = vmatpush.msra.mxu0 0.0
    %142 = vmatpush.msra.mxu0 0.0
    %143 = vmatpush.msra.mxu0 0.0
    %144 = vmatpush.msra.mxu0 0.0
    %145 = vmatpush.msra.mxu0 0.0
    %146 = vmatpush.msra.mxu0 0.0
    %147 = vmatpush.msra.mxu0 0.0
    %148 = vmatpush.msra.mxu0 %v129
    %149 = vmatpush.msra.mxu0 %v128
    %150 = vmatpush.msra.mxu0 %v127
    %151 = vmatpush.msra.mxu0 %v126
    %152 = vmatmul.f32.gmra.mxu0 %v131
    %v153 = vpop.f32.mrf.mxu0
    %v154 = vadd.f32 0.0, %v153
    %155 = vmatmul.f32.gmra.mxu0 %v134
    %v156 = vpop.f32.mrf.mxu0
    %v157 = vadd.f32 0.0, %v156
    %158 = vdwg.mxu0
    %s159 = scalar_lea.vmem %s5, 256
    %v160 = vld [vmem:[%s159] sm:$0xff]
    %v161 = vld [vmem:[%s159 + $0x8] sm:$0xff]
    %v162 = vld [vmem:[%s159 + $0x10] sm:$0xff]
    %v163 = vld [vmem:[%s159 + $0x18] sm:$0xff]
    %164 = vmatpush.msra.mxu0 0.0
    %165 = vmatpush.msra.mxu0 0.0
    %166 = vmatpush.msra.mxu0 0.0
    %167 = vmatpush.msra.mxu0 0.0
    %168 = vmatpush.msra.mxu0 0.0
    %169 = vmatpush.msra.mxu0 0.0
    %170 = vmatpush.msra.mxu0 0.0
    %171 = vmatpush.msra.mxu0 0.0
    %172 = vmatpush.msra.mxu0 0.0
    %173 = vmatpush.msra.mxu0 0.0
    %174 = vmatpush.msra.mxu0 0.0
    %175 = vmatpush.msra.mxu0 0.0
    %176 = vmatpush.msra.mxu0 %v163
    %177 = vmatpush.msra.mxu0 %v162
    %178 = vmatpush.msra.mxu0 %v161
    %179 = vmatpush.msra.mxu0 %v160
    %180 = vmatmul.f32.gmra.mxu0 %v131
    %v181 = vpop.f32.mrf.mxu0
    %v182 = vadd.f32 0.0, %v181
    %183 = vmatmul.f32.gmra.mxu0 %v134
    %v184 = vpop.f32.mrf.mxu0
    %v185 = vadd.f32 0.0, %v184
    %186 = vdwg.mxu0
    %vm187 = vcmask 64512
    %v189 = vsel %vm187, %v120, 0
    %v192 = vsel %vm187, %v154, 0
    %194 = vmatpush.xpose.msra.mxu0 0.0
    %195 = vmatpush.xpose.msra.mxu0 0.0
    %196 = vmatpush.xpose.msra.mxu0 0.0
    %197 = vmatpush.xpose.msra.mxu0 0.0
    %198 = vmatpush.xpose.msra.mxu0 0.0
    %199 = vmatpush.xpose.msra.mxu0 0.0
    %200 = vmatpush.xpose.msra.mxu0 0.0
    %201 = vmatpush.xpose.msra.mxu0 0.0
    %202 = vmatpush.xpose.msra.mxu0 0.0
    %203 = vmatpush.xpose.msra.mxu0 0.0
    %204 = vmatpush.xpose.msra.mxu0 0.0
    %205 = vmatpush.xpose.msra.mxu0 0.0
    %206 = vmatpush.xpose.msra.mxu0 0.0
    %207 = vmatpush.xpose.msra.mxu0 0.0
    %208 = vmatpush.xpose.msra.mxu0 0.0
    %209 = vmatpush.xpose.msra.mxu0 %v192
    %210 = vmatmul.f32.gmra.mxu0 %v189
    %v211 = vpop.f32.mrf.mxu0
    %v212 = vadd.f32 %v90, %v211
    %213 = vdwg.mxu0
    %v215 = vsel %vm187, %v123, 0
    %v218 = vsel %vm187, %v157, 0
    %220 = vmatpush.xpose.msra.mxu0 0.0
    %221 = vmatpush.xpose.msra.mxu0 0.0
    %222 = vmatpush.xpose.msra.mxu0 0.0
    %223 = vmatpush.xpose.msra.mxu0 0.0
    %224 = vmatpush.xpose.msra.mxu0 0.0
    %225 = vmatpush.xpose.msra.mxu0 0.0
    %226 = vmatpush.xpose.msra.mxu0 0.0
    %227 = vmatpush.xpose.msra.mxu0 0.0
    %228 = vmatpush.xpose.msra.mxu0 0.0
    %229 = vmatpush.xpose.msra.mxu0 0.0
    %230 = vmatpush.xpose.msra.mxu0 0.0
    %231 = vmatpush.xpose.msra.mxu0 0.0
    %232 = vmatpush.xpose.msra.mxu0 0.0
    %233 = vmatpush.xpose.msra.mxu0 0.0
    %234 = vmatpush.xpose.msra.mxu0 0.0
    %235 = vmatpush.xpose.msra.mxu0 %v218
    %236 = vmatmul.f32.gmra.mxu0 %v215
    %v237 = vpop.f32.mrf.mxu0
    %v238 = vadd.f32 %v91, %v237
    %239 = vdwg.mxu0
    %v240 = vsel %vm187, %v212, -inf
    %241 = vmax.xlane.f32.xlu0 %v240
    %v242 = vpop.xlane.xlu0 %241
    %v243 = vsel %vm187, %v238, -inf
    %244 = vmax.xlane.f32.xlu0 %v243
    %v245 = vpop.xlane.xlu0 %244
    %v246 = vsub.f32 %v212, %v242
    %v247 = vsub.f32 %v238, %v245
    %v248 = vmul.f32 %v246, 1.442695
    %v249 = vpow.pop %v248
    %v250 = vmul.f32 %v247, 1.442695
    %v251 = vpow.pop %v250
    %v252 = vsel %vm187, %v249, 0.0
    %253 = vadd.xlane.f32.xlu0 %v252
    %v254 = vpop.xlane.xlu0 %253
    %v255 = vsel %vm187, %v251, 0.0
    %256 = vadd.xlane.f32.xlu0 %v255
    %v257 = vpop.xlane.xlu0 %256
    %v258 = vrcp.pop %v254
    %v259 = vrcp.pop %v257
    %v260 = vmul.f32 %v249, %v258
    %v261 = vmul.f32 %v251, %v259
    %v263 = vsel %vm187, %v260, 0
    %265 = vmatpush.msra.mxu0 0.0
    %266 = vmatpush.msra.mxu0 0.0
    %267 = vmatpush.msra.mxu0 0.0
    %268 = vmatpush.msra.mxu0 0.0
    %269 = vmatpush.msra.mxu0 0.0
    %270 = vmatpush.msra.mxu0 0.0
    %271 = vmatpush.msra.mxu0 0.0
    %272 = vmatpush.msra.mxu0 0.0
    %273 = vmatpush.msra.mxu0 0.0
    %274 = vmatpush.msra.mxu0 0.0
    %275 = vmatpush.msra.mxu0 0.0
    %276 = vmatpush.msra.mxu0 0.0
    %277 = vmatpush.msra.mxu0 0.0
    %278 = vmatpush.msra.mxu0 0.0
    %279 = vmatpush.msra.mxu0 0.0
    %280 = vmatpush.msra.mxu0 %v182
    %281 = vmatmul.f32.gmra.mxu0 %v263
    %v282 = vpop.f32.mrf.mxu0
    %v283 = vadd.f32 0.0, %v282
    %284 = vdwg.mxu0
    %v286 = vsel %vm187, %v261, 0
    %288 = vmatpush.msra.mxu0 0.0
    %289 = vmatpush.msra.mxu0 0.0
    %290 = vmatpush.msra.mxu0 0.0
    %291 = vmatpush.msra.mxu0 0.0
    %292 = vmatpush.msra.mxu0 0.0
    %293 = vmatpush.msra.mxu0 0.0
    %294 = vmatpush.msra.mxu0 0.0
    %295 = vmatpush.msra.mxu0 0.0
    %296 = vmatpush.msra.mxu0 0.0
    %297 = vmatpush.msra.mxu0 0.0
    %298 = vmatpush.msra.mxu0 0.0
    %299 = vmatpush.msra.mxu0 0.0
    %300 = vmatpush.msra.mxu0 0.0
    %301 = vmatpush.msra.mxu0 0.0
    %302 = vmatpush.msra.mxu0 0.0
    %303 = vmatpush.msra.mxu0 %v185
    %304 = vmatmul.f32.gmra.mxu0 %v286
    %v305 = vpop.f32.mrf.mxu0
    %v306 = vadd.f32 0.0, %v305
    %307 = vdwg.mxu0
    %v308 = vld [vmem:[%s6] sm:$0xff]
    %s309 = scalar_lea.vmem %s5, 32
    %v310 = vld [vmem:[%s309] sm:$0xff]
    %v311 = vld [vmem:[%s309 + $0x8] sm:$0xff]
    %v312 = vld [vmem:[%s309 + $0x10] sm:$0xff]
    %v313 = vld [vmem:[%s309 + $0x18] sm:$0xff]
    %314 = vmatpush.msra.mxu0 0.0
    %315 = vmatpush.msra.mxu0 0.0
    %316 = vmatpush.msra.mxu0 0.0
    %317 = vmatpush.msra.mxu0 0.0
    %318 = vmatpush.msra.mxu0 0.0
    %319 = vmatpush.msra.mxu0 0.0
    %320 = vmatpush.msra.mxu0 0.0
    %321 = vmatpush.msra.mxu0 0.0
    %322 = vmatpush.msra.mxu0 0.0
    %323 = vmatpush.msra.mxu0 0.0
    %324 = vmatpush.msra.mxu0 0.0
    %325 = vmatpush.msra.mxu0 0.0
    %326 = vmatpush.msra.mxu0 %v313
    %327 = vmatpush.msra.mxu0 %v312
    %328 = vmatpush.msra.mxu0 %v311
    %329 = vmatpush.msra.mxu0 %v310
    %330 = vmatmul.f32.gmra.mxu0 %v97
    %v331 = vpop.f32.mrf.mxu0
    %v332 = vadd.f32 0.0, %v331
    %333 = vmatmul.f32.gmra.mxu0 %v100
    %v334 = vpop.f32.mrf.mxu0
    %v335 = vadd.f32 0.0, %v334
    %336 = vdwg.mxu0
    %s337 = scalar_lea.vmem %s5, 160
    %v338 = vld [vmem:[%s337] sm:$0xff]
    %v339 = vld [vmem:[%s337 + $0x8] sm:$0xff]
    %v340 = vld [vmem:[%s337 + $0x10] sm:$0xff]
    %v341 = vld [vmem:[%s337 + $0x18] sm:$0xff]
    %342 = vmatpush.msra.mxu0 0.0
    %343 = vmatpush.msra.mxu0 0.0
    %344 = vmatpush.msra.mxu0 0.0
    %345 = vmatpush.msra.mxu0 0.0
    %346 = vmatpush.msra.mxu0 0.0
    %347 = vmatpush.msra.mxu0 0.0
    %348 = vmatpush.msra.mxu0 0.0
    %349 = vmatpush.msra.mxu0 0.0
    %350 = vmatpush.msra.mxu0 0.0
    %351 = vmatpush.msra.mxu0 0.0
    %352 = vmatpush.msra.mxu0 0.0
    %353 = vmatpush.msra.mxu0 0.0
    %354 = vmatpush.msra.mxu0 %v341
    %355 = vmatpush.msra.mxu0 %v340
    %356 = vmatpush.msra.mxu0 %v339
    %357 = vmatpush.msra.mxu0 %v338
    %358 = vmatmul.f32.gmra.mxu0 %v131
    %v359 = vpop.f32.mrf.mxu0
    %v360 = vadd.f32 0.0, %v359
    %361 = vmatmul.f32.gmra.mxu0 %v134
    %v362 = vpop.f32.mrf.mxu0
    %v363 = vadd.f32 0.0, %v362
    %364 = vdwg.mxu0
    %s365 = scalar_lea.vmem %s5, 288
    %v366 = vld [vmem:[%s365] sm:$0xff]
    %v367 = vld [vmem:[%s365 + $0x8] sm:$0xff]
    %v368 = vld [vmem:[%s365 + $0x10] sm:$0xff]
    %v369 = vld [vmem:[%s365 + $0x18] sm:$0xff]
    %370 = vmatpush.msra.mxu0 0.0
    %371 = vmatpush.msra.mxu0 0.0
    %372 = vmatpush.msra.mxu0 0.0
    %373 = vmatpush.msra.mxu0 0.0
    %374 = vmatpush.msra.mxu0 0.0
    %375 = vmatpush.msra.mxu0 0.0
    %376 = vmatpush.msra.mxu0 0.0
    %377 = vmatpush.msra.mxu0 0.0
    %378 = vmatpush.msra.mxu0 0.0
    %379 = vmatpush.msra.mxu0 0.0
    %380 = vmatpush.msra.mxu0 0.0
    %381 = vmatpush.msra.mxu0 0.0
    %382 = vmatpush.msra.mxu0 %v369
    %383 = vmatpush.msra.mxu0 %v368
    %384 = vmatpush.msra.mxu0 %v367
    %385 = vmatpush.msra.mxu0 %v366
    %386 = vmatmul.f32.gmra.mxu0 %v131
    %v387 = vpop.f32.mrf.mxu0
    %v388 = vadd.f32 0.0, %v387
    %389 = vmatmul.f32.gmra.mxu0 %v134
    %v390 = vpop.f32.mrf.mxu0
    %v391 = vadd.f32 0.0, %v390
    %392 = vdwg.mxu0
    %v394 = vsel %vm187, %v332, 0
    %v397 = vsel %vm187, %v360, 0
    %399 = vmatpush.xpose.msra.mxu0 0.0
    %400 = vmatpush.xpose.msra.mxu0 0.0
    %401 = vmatpush.xpose.msra.mxu0 0.0
    %402 = vmatpush.xpose.msra.mxu0 0.0
    %403 = vmatpush.xpose.msra.mxu0 0.0
    %404 = vmatpush.xpose.msra.mxu0 0.0
    %405 = vmatpush.xpose.msra.mxu0 0.0
    %406 = vmatpush.xpose.msra.mxu0 0.0
    %407 = vmatpush.xpose.msra.mxu0 0.0
    %408 = vmatpush.xpose.msra.mxu0 0.0
    %409 = vmatpush.xpose.msra.mxu0 0.0
    %410 = vmatpush.xpose.msra.mxu0 0.0
    %411 = vmatpush.xpose.msra.mxu0 0.0
    %412 = vmatpush.xpose.msra.mxu0 0.0
    %413 = vmatpush.xpose.msra.mxu0 0.0
    %414 = vmatpush.xpose.msra.mxu0 %v397
    %415 = vmatmul.f32.gmra.mxu0 %v394
    %v416 = vpop.f32.mrf.mxu0
    %v417 = vadd.f32 %v90, %v416
    %418 = vdwg.mxu0
    %v420 = vsel %vm187, %v335, 0
    %v423 = vsel %vm187, %v363, 0
    %425 = vmatpush.xpose.msra.mxu0 0.0
    %426 = vmatpush.xpose.msra.mxu0 0.0
    %427 = vmatpush.xpose.msra.mxu0 0.0
    %428 = vmatpush.xpose.msra.mxu0 0.0
    %429 = vmatpush.xpose.msra.mxu0 0.0
    %430 = vmatpush.xpose.msra.mxu0 0.0
    %431 = vmatpush.xpose.msra.mxu0 0.0
    %432 = vmatpush.xpose.msra.mxu0 0.0
    %433 = vmatpush.xpose.msra.mxu0 0.0
    %434 = vmatpush.xpose.msra.mxu0 0.0
    %435 = vmatpush.xpose.msra.mxu0 0.0
    %436 = vmatpush.xpose.msra.mxu0 0.0
    %437 = vmatpush.xpose.msra.mxu0 0.0
    %438 = vmatpush.xpose.msra.mxu0 0.0
    %439 = vmatpush.xpose.msra.mxu0 0.0
    %440 = vmatpush.xpose.msra.mxu0 %v423
    %441 = vmatmul.f32.gmra.mxu0 %v420
    %v442 = vpop.f32.mrf.mxu0
    %v443 = vadd.f32 %v91, %v442
    %444 = vdwg.mxu0
    %v445 = vsel %vm187, %v417, -inf
    %446 = vmax.xlane.f32.xlu0 %v445
    %v447 = vpop.xlane.xlu0 %446
    %v448 = vsel %vm187, %v443, -inf
    %449 = vmax.xlane.f32.xlu0 %v448
    %v450 = vpop.xlane.xlu0 %449
    %v451 = vsub.f32 %v417, %v447
    %v452 = vsub.f32 %v443, %v450
    %v453 = vmul.f32 %v451, 1.442695
    %v454 = vpow.pop %v453
    %v455 = vmul.f32 %v452, 1.442695
    %v456 = vpow.pop %v455
    %v457 = vsel %vm187, %v454, 0.0
    %458 = vadd.xlane.f32.xlu0 %v457
    %v459 = vpop.xlane.xlu0 %458
    %v460 = vsel %vm187, %v456, 0.0
    %461 = vadd.xlane.f32.xlu0 %v460
    %v462 = vpop.xlane.xlu0 %461
    %v463 = vrcp.pop %v459
    %v464 = vrcp.pop %v462
    %v465 = vmul.f32 %v454, %v463
    %v466 = vmul.f32 %v456, %v464
    %v468 = vsel %vm187, %v465, 0
    %470 = vmatpush.msra.mxu0 0.0
    %471 = vmatpush.msra.mxu0 0.0
    %472 = vmatpush.msra.mxu0 0.0
    %473 = vmatpush.msra.mxu0 0.0
    %474 = vmatpush.msra.mxu0 0.0
    %475 = vmatpush.msra.mxu0 0.0
    %476 = vmatpush.msra.mxu0 0.0
    %477 = vmatpush.msra.mxu0 0.0
    %478 = vmatpush.msra.mxu0 0.0
    %479 = vmatpush.msra.mxu0 0.0
    %480 = vmatpush.msra.mxu0 0.0
    %481 = vmatpush.msra.mxu0 0.0
    %482 = vmatpush.msra.mxu0 0.0
    %483 = vmatpush.msra.mxu0 0.0
    %484 = vmatpush.msra.mxu0 0.0
    %485 = vmatpush.msra.mxu0 %v388
    %486 = vmatmul.f32.gmra.mxu0 %v468
    %v487 = vpop.f32.mrf.mxu0
    %v488 = vadd.f32 0.0, %v487
    %489 = vdwg.mxu0
    %v491 = vsel %vm187, %v466, 0
    %493 = vmatpush.msra.mxu0 0.0
    %494 = vmatpush.msra.mxu0 0.0
    %495 = vmatpush.msra.mxu0 0.0
    %496 = vmatpush.msra.mxu0 0.0
    %497 = vmatpush.msra.mxu0 0.0
    %498 = vmatpush.msra.mxu0 0.0
    %499 = vmatpush.msra.mxu0 0.0
    %500 = vmatpush.msra.mxu0 0.0
    %501 = vmatpush.msra.mxu0 0.0
    %502 = vmatpush.msra.mxu0 0.0
    %503 = vmatpush.msra.mxu0 0.0
    %504 = vmatpush.msra.mxu0 0.0
    %505 = vmatpush.msra.mxu0 0.0
    %506 = vmatpush.msra.mxu0 0.0
    %507 = vmatpush.msra.mxu0 0.0
    %508 = vmatpush.msra.mxu0 %v391
    %509 = vmatmul.f32.gmra.mxu0 %v491
    %v510 = vpop.f32.mrf.mxu0
    %v511 = vadd.f32 0.0, %v510
    %512 = vdwg.mxu0
    %s513 = scalar_lea.vmem %s6, 8
    %v514 = vld [vmem:[%s513] sm:$0xff]
    %v516 = vsel %vm187, %v488, 0
    %v519 = vsel %vm187, %v511, 0
    %521 = vmatpush.msra.mxu0 0.0
    %522 = vmatpush.msra.mxu0 0.0
    %523 = vmatpush.msra.mxu0 0.0
    %524 = vmatpush.msra.mxu0 0.0
    %525 = vmatpush.msra.mxu0 0.0
    %526 = vmatpush.msra.mxu0 0.0
    %527 = vmatpush.msra.mxu0 0.0
    %528 = vmatpush.msra.mxu0 0.0
    %529 = vmatpush.msra.mxu0 0.0
    %530 = vmatpush.msra.mxu0 0.0
    %531 = vmatpush.msra.mxu0 0.0
    %532 = vmatpush.msra.mxu0 0.0
    %533 = vmatpush.msra.mxu0 0.0
    %534 = vmatpush.msra.mxu0 0.0
    %535 = vmatpush.msra.mxu0 0.0
    %536 = vmatpush.msra.mxu0 %v514
    %537 = vmatmul.f32.gmra.mxu0 %v516
    %v538 = vpop.f32.mrf.mxu0
    %v539 = vadd.f32 0.0, %v538
    %540 = vmatmul.f32.gmra.mxu0 %v519
    %v541 = vpop.f32.mrf.mxu0
    %v542 = vadd.f32 0.0, %v541
    %543 = vdwg.mxu0
    %v545 = vsel %vm187, %v283, 0
    %v548 = vsel %vm187, %v306, 0
    %550 = vmatpush.msra.mxu0 0.0
    %551 = vmatpush.msra.mxu0 0.0
    %552 = vmatpush.msra.mxu0 0.0
    %553 = vmatpush.msra.mxu0 0.0
    %554 = vmatpush.msra.mxu0 0.0
    %555 = vmatpush.msra.mxu0 0.0
    %556 = vmatpush.msra.mxu0 0.0
    %557 = vmatpush.msra.mxu0 0.0
    %558 = vmatpush.msra.mxu0 0.0
    %559 = vmatpush.msra.mxu0 0.0
    %560 = vmatpush.msra.mxu0 0.0
    %561 = vmatpush.msra.mxu0 0.0
    %562 = vmatpush.msra.mxu0 0.0
    %563 = vmatpush.msra.mxu0 0.0
    %564 = vmatpush.msra.mxu0 0.0
    %565 = vmatpush.msra.mxu0 %v308
    %566 = vmatmul.f32.gmra.mxu0 %v545
    %v567 = vpop.f32.mrf.mxu0
    %v568 = vadd.f32 %v539, %v567
    %569 = vmatmul.f32.gmra.mxu0 %v548
    %v570 = vpop.f32.mrf.mxu0
    %v571 = vadd.f32 %v542, %v570
    %572 = vdwg.mxu0
    %s573 = scalar_lea.vmem %s5, 64
    %v574 = vld [vmem:[%s573] sm:$0xff]
    %v575 = vld [vmem:[%s573 + $0x8] sm:$0xff]
    %v576 = vld [vmem:[%s573 + $0x10] sm:$0xff]
    %v577 = vld [vmem:[%s573 + $0x18] sm:$0xff]
    %578 = vmatpush.msra.mxu0 0.0
    %579 = vmatpush.msra.mxu0 0.0
    %580 = vmatpush.msra.mxu0 0.0
    %581 = vmatpush.msra.mxu0 0.0
    %582 = vmatpush.msra.mxu0 0.0
    %583 = vmatpush.msra.mxu0 0.0
    %584 = vmatpush.msra.mxu0 0.0
    %585 = vmatpush.msra.mxu0 0.0
    %586 = vmatpush.msra.mxu0 0.0
    %587 = vmatpush.msra.mxu0 0.0
    %588 = vmatpush.msra.mxu0 0.0
    %589 = vmatpush.msra.mxu0 0.0
    %590 = vmatpush.msra.mxu0 %v577
    %591 = vmatpush.msra.mxu0 %v576
    %592 = vmatpush.msra.mxu0 %v575
    %593 = vmatpush.msra.mxu0 %v574
    %594 = vmatmul.f32.gmra.mxu0 %v97
    %v595 = vpop.f32.mrf.mxu0
    %v596 = vadd.f32 0.0, %v595
    %597 = vmatmul.f32.gmra.mxu0 %v100
    %v598 = vpop.f32.mrf.mxu0
    %v599 = vadd.f32 0.0, %v598
    %600 = vdwg.mxu0
    %s601 = scalar_lea.vmem %s5, 192
    %v602 = vld [vmem:[%s601] sm:$0xff]
    %v603 = vld [vmem:[%s601 + $0x8] sm:$0xff]
    %v604 = vld [vmem:[%s601 + $0x10] sm:$0xff]
    %v605 = vld [vmem:[%s601 + $0x18] sm:$0xff]
    %606 = vmatpush.msra.mxu0 0.0
    %607 = vmatpush.msra.mxu0 0.0
    %608 = vmatpush.msra.mxu0 0.0
    %609 = vmatpush.msra.mxu0 0.0
    %610 = vmatpush.msra.mxu0 0.0
    %611 = vmatpush.msra.mxu0 0.0
    %612 = vmatpush.msra.mxu0 0.0
    %613 = vmatpush.msra.mxu0 0.0
    %614 = vmatpush.msra.mxu0 0.0
    %615 = vmatpush.msra.mxu0 0.0
    %616 = vmatpush.msra.mxu0 0.0
    %617 = vmatpush.msra.mxu0 0.0
    %618 = vmatpush.msra.mxu0 %v605
    %619 = vmatpush.msra.mxu0 %v604
    %620 = vmatpush.msra.mxu0 %v603
    %621 = vmatpush.msra.mxu0 %v602
    %622 = vmatmul.f32.gmra.mxu0 %v131
    %v623 = vpop.f32.mrf.mxu0
    %v624 = vadd.f32 0.0, %v623
    %625 = vmatmul.f32.gmra.mxu0 %v134
    %v626 = vpop.f32.mrf.mxu0
    %v627 = vadd.f32 0.0, %v626
    %628 = vdwg.mxu0
    %s629 = scalar_lea.vmem %s5, 320
    %v630 = vld [vmem:[%s629] sm:$0xff]
    %v631 = vld [vmem:[%s629 + $0x8] sm:$0xff]
    %v632 = vld [vmem:[%s629 + $0x10] sm:$0xff]
    %v633 = vld [vmem:[%s629 + $0x18] sm:$0xff]
    %634 = vmatpush.msra.mxu0 0.0
    %635 = vmatpush.msra.mxu0 0.0
    %636 = vmatpush.msra.mxu0 0.0
    %637 = vmatpush.msra.mxu0 0.0
    %638 = vmatpush.msra.mxu0 0.0
    %639 = vmatpush.msra.mxu0 0.0
    %640 = vmatpush.msra.mxu0 0.0
    %641 = vmatpush.msra.mxu0 0.0
    %642 = vmatpush.msra.mxu0 0.0
    %643 = vmatpush.msra.mxu0 0.0
    %644 = vmatpush.msra.mxu0 0.0
    %645 = vmatpush.msra.mxu0 0.0
    %646 = vmatpush.msra.mxu0 %v633
    %647 = vmatpush.msra.mxu0 %v632
    %648 = vmatpush.msra.mxu0 %v631
    %649 = vmatpush.msra.mxu0 %v630
    %650 = vmatmul.f32.gmra.mxu0 %v131
    %v651 = vpop.f32.mrf.mxu0
    %v652 = vadd.f32 0.0, %v651
    %653 = vmatmul.f32.gmra.mxu0 %v134
    %v654 = vpop.f32.mrf.mxu0
    %v655 = vadd.f32 0.0, %v654
    %656 = vdwg.mxu0
    %v658 = vsel %vm187, %v596, 0
    %v661 = vsel %vm187, %v624, 0
    %663 = vmatpush.xpose.msra.mxu0 0.0
    %664 = vmatpush.xpose.msra.mxu0 0.0
    %665 = vmatpush.xpose.msra.mxu0 0.0
    %666 = vmatpush.xpose.msra.mxu0 0.0
    %667 = vmatpush.xpose.msra.mxu0 0.0
    %668 = vmatpush.xpose.msra.mxu0 0.0
    %669 = vmatpush.xpose.msra.mxu0 0.0
    %670 = vmatpush.xpose.msra.mxu0 0.0
    %671 = vmatpush.xpose.msra.mxu0 0.0
    %672 = vmatpush.xpose.msra.mxu0 0.0
    %673 = vmatpush.xpose.msra.mxu0 0.0
    %674 = vmatpush.xpose.msra.mxu0 0.0
    %675 = vmatpush.xpose.msra.mxu0 0.0
    %676 = vmatpush.xpose.msra.mxu0 0.0
    %677 = vmatpush.xpose.msra.mxu0 0.0
    %678 = vmatpush.xpose.msra.mxu0 %v661
    %679 = vmatmul.f32.gmra.mxu0 %v658
    %v680 = vpop.f32.mrf.mxu0
    %v681 = vadd.f32 %v90, %v680
    %682 = vdwg.mxu0
    %v684 = vsel %vm187, %v599, 0
    %v687 = vsel %vm187, %v627, 0
    %689 = vmatpush.xpose.msra.mxu0 0.0
    %690 = vmatpush.xpose.msra.mxu0 0.0
    %691 = vmatpush.xpose.msra.mxu0 0.0
    %692 = vmatpush.xpose.msra.mxu0 0.0
    %693 = vmatpush.xpose.msra.mxu0 0.0
    %694 = vmatpush.xpose.msra.mxu0 0.0
    %695 = vmatpush.xpose.msra.mxu0 0.0
    %696 = vmatpush.xpose.msra.mxu0 0.0
    %697 = vmatpush.xpose.msra.mxu0 0.0
    %698 = vmatpush.xpose.msra.mxu0 0.0
    %699 = vmatpush.xpose.msra.mxu0 0.0
    %700 = vmatpush.xpose.msra.mxu0 0.0
    %701 = vmatpush.xpose.msra.mxu0 0.0
    %702 = vmatpush.xpose.msra.mxu0 0.0
    %703 = vmatpush.xpose.msra.mxu0 0.0
    %704 = vmatpush.xpose.msra.mxu0 %v687
    %705 = vmatmul.f32.gmra.mxu0 %v684
    %v706 = vpop.f32.mrf.mxu0
    %v707 = vadd.f32 %v91, %v706
    %708 = vdwg.mxu0
    %v709 = vsel %vm187, %v681, -inf
    %710 = vmax.xlane.f32.xlu0 %v709
    %v711 = vpop.xlane.xlu0 %710
    %v712 = vsel %vm187, %v707, -inf
    %713 = vmax.xlane.f32.xlu0 %v712
    %v714 = vpop.xlane.xlu0 %713
    %v715 = vsub.f32 %v681, %v711
    %v716 = vsub.f32 %v707, %v714
    %v717 = vmul.f32 %v715, 1.442695
    %v718 = vpow.pop %v717
    %v719 = vmul.f32 %v716, 1.442695
    %v720 = vpow.pop %v719
    %v721 = vsel %vm187, %v718, 0.0
    %722 = vadd.xlane.f32.xlu0 %v721
    %v723 = vpop.xlane.xlu0 %722
    %v724 = vsel %vm187, %v720, 0.0
    %725 = vadd.xlane.f32.xlu0 %v724
    %v726 = vpop.xlane.xlu0 %725
    %v727 = vrcp.pop %v723
    %v728 = vrcp.pop %v726
    %v729 = vmul.f32 %v718, %v727
    %v730 = vmul.f32 %v720, %v728
    %v732 = vsel %vm187, %v729, 0
    %734 = vmatpush.msra.mxu0 0.0
    %735 = vmatpush.msra.mxu0 0.0
    %736 = vmatpush.msra.mxu0 0.0
    %737 = vmatpush.msra.mxu0 0.0
    %738 = vmatpush.msra.mxu0 0.0
    %739 = vmatpush.msra.mxu0 0.0
    %740 = vmatpush.msra.mxu0 0.0
    %741 = vmatpush.msra.mxu0 0.0
    %742 = vmatpush.msra.mxu0 0.0
    %743 = vmatpush.msra.mxu0 0.0
    %744 = vmatpush.msra.mxu0 0.0
    %745 = vmatpush.msra.mxu0 0.0
    %746 = vmatpush.msra.mxu0 0.0
    %747 = vmatpush.msra.mxu0 0.0
    %748 = vmatpush.msra.mxu0 0.0
    %749 = vmatpush.msra.mxu0 %v652
    %750 = vmatmul.f32.gmra.mxu0 %v732
    %v751 = vpop.f32.mrf.mxu0
    %v752 = vadd.f32 0.0, %v751
    %753 = vdwg.mxu0
    %v755 = vsel %vm187, %v730, 0
    %757 = vmatpush.msra.mxu0 0.0
    %758 = vmatpush.msra.mxu0 0.0
    %759 = vmatpush.msra.mxu0 0.0
    %760 = vmatpush.msra.mxu0 0.0
    %761 = vmatpush.msra.mxu0 0.0
    %762 = vmatpush.msra.mxu0 0.0
    %763 = vmatpush.msra.mxu0 0.0
    %764 = vmatpush.msra.mxu0 0.0
    %765 = vmatpush.msra.mxu0 0.0
    %766 = vmatpush.msra.mxu0 0.0
    %767 = vmatpush.msra.mxu0 0.0
    %768 = vmatpush.msra.mxu0 0.0
    %769 = vmatpush.msra.mxu0 0.0
    %770 = vmatpush.msra.mxu0 0.0
    %771 = vmatpush.msra.mxu0 0.0
    %772 = vmatpush.msra.mxu0 %v655
    %773 = vmatmul.f32.gmra.mxu0 %v755
    %v774 = vpop.f32.mrf.mxu0
    %v775 = vadd.f32 0.0, %v774
    %776 = vdwg.mxu0
    %s777 = scalar_lea.vmem %s6, 16
    %v778 = vld [vmem:[%s777] sm:$0xff]
    %v780 = vsel %vm187, %v752, 0
    %v783 = vsel %vm187, %v775, 0
    %785 = vmatpush.msra.mxu0 0.0
    %786 = vmatpush.msra.mxu0 0.0
    %787 = vmatpush.msra.mxu0 0.0
    %788 = vmatpush.msra.mxu0 0.0
    %789 = vmatpush.msra.mxu0 0.0
    %790 = vmatpush.msra.mxu0 0.0
    %791 = vmatpush.msra.mxu0 0.0
    %792 = vmatpush.msra.mxu0 0.0
    %793 = vmatpush.msra.mxu0 0.0
    %794 = vmatpush.msra.mxu0 0.0
    %795 = vmatpush.msra.mxu0 0.0
    %796 = vmatpush.msra.mxu0 0.0
    %797 = vmatpush.msra.mxu0 0.0
    %798 = vmatpush.msra.mxu0 0.0
    %799 = vmatpush.msra.mxu0 0.0
    %800 = vmatpush.msra.mxu0 %v778
    %801 = vmatmul.f32.gmra.mxu0 %v780
    %v802 = vpop.f32.mrf.mxu0
    %v803 = vadd.f32 0.0, %v802
    %804 = vmatmul.f32.gmra.mxu0 %v783
    %v805 = vpop.f32.mrf.mxu0
    %v806 = vadd.f32 0.0, %v805
    %807 = vdwg.mxu0
    %v808 = vadd.f32 %v568, %v803
    %v809 = vadd.f32 %v571, %v806
    %s810 = scalar_lea.vmem %s5, 96
    %v811 = vld [vmem:[%s810] sm:$0xff]
    %v812 = vld [vmem:[%s810 + $0x8] sm:$0xff]
    %v813 = vld [vmem:[%s810 + $0x10] sm:$0xff]
    %v814 = vld [vmem:[%s810 + $0x18] sm:$0xff]
    %815 = vmatpush.msra.mxu0 0.0
    %816 = vmatpush.msra.mxu0 0.0
    %817 = vmatpush.msra.mxu0 0.0
    %818 = vmatpush.msra.mxu0 0.0
    %819 = vmatpush.msra.mxu0 0.0
    %820 = vmatpush.msra.mxu0 0.0
    %821 = vmatpush.msra.mxu0 0.0
    %822 = vmatpush.msra.mxu0 0.0
    %823 = vmatpush.msra.mxu0 0.0
    %824 = vmatpush.msra.mxu0 0.0
    %825 = vmatpush.msra.mxu0 0.0
    %826 = vmatpush.msra.mxu0 0.0
    %827 = vmatpush.msra.mxu0 %v814
    %828 = vmatpush.msra.mxu0 %v813
    %829 = vmatpush.msra.mxu0 %v812
    %830 = vmatpush.msra.mxu0 %v811
    %831 = vmatmul.f32.gmra.mxu0 %v97
    %v832 = vpop.f32.mrf.mxu0
    %v833 = vadd.f32 0.0, %v832
    %834 = vmatmul.f32.gmra.mxu0 %v100
    %v835 = vpop.f32.mrf.mxu0
    %v836 = vadd.f32 0.0, %v835
    %837 = vdwg.mxu0
    %s838 = scalar_lea.vmem %s5, 224
    %v839 = vld [vmem:[%s838] sm:$0xff]
    %v840 = vld [vmem:[%s838 + $0x8] sm:$0xff]
    %v841 = vld [vmem:[%s838 + $0x10] sm:$0xff]
    %v842 = vld [vmem:[%s838 + $0x18] sm:$0xff]
    %843 = vmatpush.msra.mxu0 0.0
    %844 = vmatpush.msra.mxu0 0.0
    %845 = vmatpush.msra.mxu0 0.0
    %846 = vmatpush.msra.mxu0 0.0
    %847 = vmatpush.msra.mxu0 0.0
    %848 = vmatpush.msra.mxu0 0.0
    %849 = vmatpush.msra.mxu0 0.0
    %850 = vmatpush.msra.mxu0 0.0
    %851 = vmatpush.msra.mxu0 0.0
    %852 = vmatpush.msra.mxu0 0.0
    %853 = vmatpush.msra.mxu0 0.0
    %854 = vmatpush.msra.mxu0 0.0
    %855 = vmatpush.msra.mxu0 %v842
    %856 = vmatpush.msra.mxu0 %v841
    %857 = vmatpush.msra.mxu0 %v840
    %858 = vmatpush.msra.mxu0 %v839
    %859 = vmatmul.f32.gmra.mxu0 %v131
    %v860 = vpop.f32.mrf.mxu0
    %v861 = vadd.f32 0.0, %v860
    %862 = vmatmul.f32.gmra.mxu0 %v134
    %v863 = vpop.f32.mrf.mxu0
    %v864 = vadd.f32 0.0, %v863
    %865 = vdwg.mxu0
    %s866 = scalar_lea.vmem %s5, 352
    %v867 = vld [vmem:[%s866] sm:$0xff]
    %v868 = vld [vmem:[%s866 + $0x8] sm:$0xff]
    %v869 = vld [vmem:[%s866 + $0x10] sm:$0xff]
    %v870 = vld [vmem:[%s866 + $0x18] sm:$0xff]
    %871 = vmatpush.msra.mxu0 0.0
    %872 = vmatpush.msra.mxu0 0.0
    %873 = vmatpush.msra.mxu0 0.0
    %874 = vmatpush.msra.mxu0 0.0
    %875 = vmatpush.msra.mxu0 0.0
    %876 = vmatpush.msra.mxu0 0.0
    %877 = vmatpush.msra.mxu0 0.0
    %878 = vmatpush.msra.mxu0 0.0
    %879 = vmatpush.msra.mxu0 0.0
    %880 = vmatpush.msra.mxu0 0.0
    %881 = vmatpush.msra.mxu0 0.0
    %882 = vmatpush.msra.mxu0 0.0
    %883 = vmatpush.msra.mxu0 %v870
    %884 = vmatpush.msra.mxu0 %v869
    %885 = vmatpush.msra.mxu0 %v868
    %886 = vmatpush.msra.mxu0 %v867
    %887 = vmatmul.f32.gmra.mxu0 %v131
    %v888 = vpop.f32.mrf.mxu0
    %v889 = vadd.f32 0.0, %v888
    %890 = vmatmul.f32.gmra.mxu0 %v134
    %v891 = vpop.f32.mrf.mxu0
    %v892 = vadd.f32 0.0, %v891
    %893 = vdwg.mxu0
    %v895 = vsel %vm187, %v833, 0
    %v898 = vsel %vm187, %v861, 0
    %900 = vmatpush.xpose.msra.mxu0 0.0
    %901 = vmatpush.xpose.msra.mxu0 0.0
    %902 = vmatpush.xpose.msra.mxu0 0.0
    %903 = vmatpush.xpose.msra.mxu0 0.0
    %904 = vmatpush.xpose.msra.mxu0 0.0
    %905 = vmatpush.xpose.msra.mxu0 0.0
    %906 = vmatpush.xpose.msra.mxu0 0.0
    %907 = vmatpush.xpose.msra.mxu0 0.0
    %908 = vmatpush.xpose.msra.mxu0 0.0
    %909 = vmatpush.xpose.msra.mxu0 0.0
    %910 = vmatpush.xpose.msra.mxu0 0.0
    %911 = vmatpush.xpose.msra.mxu0 0.0
    %912 = vmatpush.xpose.msra.mxu0 0.0
    %913 = vmatpush.xpose.msra.mxu0 0.0
    %914 = vmatpush.xpose.msra.mxu0 0.0
    %915 = vmatpush.xpose.msra.mxu0 %v898
    %916 = vmatmul.f32.gmra.mxu0 %v895
    %v917 = vpop.f32.mrf.mxu0
    %v918 = vadd.f32 %v90, %v917
    %919 = vdwg.mxu0
    %v921 = vsel %vm187, %v836, 0
    %v924 = vsel %vm187, %v864, 0
    %926 = vmatpush.xpose.msra.mxu0 0.0
    %927 = vmatpush.xpose.msra.mxu0 0.0
    %928 = vmatpush.xpose.msra.mxu0 0.0
    %929 = vmatpush.xpose.msra.mxu0 0.0
    %930 = vmatpush.xpose.msra.mxu0 0.0
    %931 = vmatpush.xpose.msra.mxu0 0.0
    %932 = vmatpush.xpose.msra.mxu0 0.0
    %933 = vmatpush.xpose.msra.mxu0 0.0
    %934 = vmatpush.xpose.msra.mxu0 0.0
    %935 = vmatpush.xpose.msra.mxu0 0.0
    %936 = vmatpush.xpose.msra.mxu0 0.0
    %937 = vmatpush.xpose.msra.mxu0 0.0
    %938 = vmatpush.xpose.msra.mxu0 0.0
    %939 = vmatpush.xpose.msra.mxu0 0.0
    %940 = vmatpush.xpose.msra.mxu0 0.0
    %941 = vmatpush.xpose.msra.mxu0 %v924
    %942 = vmatmul.f32.gmra.mxu0 %v921
    %v943 = vpop.f32.mrf.mxu0
    %v944 = vadd.f32 %v91, %v943
    %945 = vdwg.mxu0
    %v946 = vsel %vm187, %v918, -inf
    %947 = vmax.xlane.f32.xlu0 %v946
    %v948 = vpop.xlane.xlu0 %947
    %v949 = vsel %vm187, %v944, -inf
    %950 = vmax.xlane.f32.xlu0 %v949
    %v951 = vpop.xlane.xlu0 %950
    %v952 = vsub.f32 %v918, %v948
    %v953 = vsub.f32 %v944, %v951
    %v954 = vmul.f32 %v952, 1.442695
    %v955 = vpow.pop %v954
    %v956 = vmul.f32 %v953, 1.442695
    %v957 = vpow.pop %v956
    %v958 = vsel %vm187, %v955, 0.0
    %959 = vadd.xlane.f32.xlu0 %v958
    %v960 = vpop.xlane.xlu0 %959
    %v961 = vsel %vm187, %v957, 0.0
    %962 = vadd.xlane.f32.xlu0 %v961
    %v963 = vpop.xlane.xlu0 %962
    %v964 = vrcp.pop %v960
    %v965 = vrcp.pop %v963
    %v966 = vmul.f32 %v955, %v964
    %v967 = vmul.f32 %v957, %v965
    %v969 = vsel %vm187, %v966, 0
    %971 = vmatpush.msra.mxu0 0.0
    %972 = vmatpush.msra.mxu0 0.0
    %973 = vmatpush.msra.mxu0 0.0
    %974 = vmatpush.msra.mxu0 0.0
    %975 = vmatpush.msra.mxu0 0.0
    %976 = vmatpush.msra.mxu0 0.0
    %977 = vmatpush.msra.mxu0 0.0
    %978 = vmatpush.msra.mxu0 0.0
    %979 = vmatpush.msra.mxu0 0.0
    %980 = vmatpush.msra.mxu0 0.0
    %981 = vmatpush.msra.mxu0 0.0
    %982 = vmatpush.msra.mxu0 0.0
    %983 = vmatpush.msra.mxu0 0.0
    %984 = vmatpush.msra.mxu0 0.0
    %985 = vmatpush.msra.mxu0 0.0
    %986 = vmatpush.msra.mxu0 %v889
    %987 = vmatmul.f32.gmra.mxu0 %v969
    %v988 = vpop.f32.mrf.mxu0
    %v989 = vadd.f32 0.0, %v988
    %990 = vdwg.mxu0
    %v992 = vsel %vm187, %v967, 0
    %994 = vmatpush.msra.mxu0 0.0
    %995 = vmatpush.msra.mxu0 0.0
    %996 = vmatpush.msra.mxu0 0.0
    %997 = vmatpush.msra.mxu0 0.0
    %998 = vmatpush.msra.mxu0 0.0
    %999 = vmatpush.msra.mxu0 0.0
    %1000 = vmatpush.msra.mxu0 0.0
    %1001 = vmatpush.msra.mxu0 0.0
    %1002 = vmatpush.msra.mxu0 0.0
    %1003 = vmatpush.msra.mxu0 0.0
    %1004 = vmatpush.msra.mxu0 0.0
    %1005 = vmatpush.msra.mxu0 0.0
    %1006 = vmatpush.msra.mxu0 0.0
    %1007 = vmatpush.msra.mxu0 0.0
    %1008 = vmatpush.msra.mxu0 0.0
    %1009 = vmatpush.msra.mxu0 %v892
    %1010 = vmatmul.f32.gmra.mxu0 %v992
    %v1011 = vpop.f32.mrf.mxu0
    %v1012 = vadd.f32 0.0, %v1011
    %1013 = vdwg.mxu0
    %s1014 = scalar_lea.vmem %s6, 24
    %v1015 = vld [vmem:[%s1014] sm:$0xff]
    %v1017 = vsel %vm187, %v989, 0
    %v1020 = vsel %vm187, %v1012, 0
    %1022 = vmatpush.msra.mxu0 0.0
    %1023 = vmatpush.msra.mxu0 0.0
    %1024 = vmatpush.msra.mxu0 0.0
    %1025 = vmatpush.msra.mxu0 0.0
    %1026 = vmatpush.msra.mxu0 0.0
    %1027 = vmatpush.msra.mxu0 0.0
    %1028 = vmatpush.msra.mxu0 0.0
    %1029 = vmatpush.msra.mxu0 0.0
    %1030 = vmatpush.msra.mxu0 0.0
    %1031 = vmatpush.msra.mxu0 0.0
    %1032 = vmatpush.msra.mxu0 0.0
    %1033 = vmatpush.msra.mxu0 0.0
    %1034 = vmatpush.msra.mxu0 0.0
    %1035 = vmatpush.msra.mxu0 0.0
    %1036 = vmatpush.msra.mxu0 0.0
    %1037 = vmatpush.msra.mxu0 %v1015
    %1038 = vmatmul.f32.gmra.mxu0 %v1017
    %v1039 = vpop.f32.mrf.mxu0
    %v1040 = vadd.f32 0.0, %v1039
    %1041 = vmatmul.f32.gmra.mxu0 %v1020
    %v1042 = vpop.f32.mrf.mxu0
    %v1043 = vadd.f32 0.0, %v1042
    %1044 = vdwg.mxu0
    %v1045 = vadd.f32 %v808, %v1040
    %v1046 = vadd.f32 %v809, %v1043
    %v1047 = vld [vmem:[%s3] sm:$0xff]
    %v1048 = vld [vmem:[%s3 + $0x8] sm:$0xff]
    %1050 = vset.pattern.permute.xlu0 0
    %1051 = vperm.xlu0 %1050, %v1047
    %v1052 = vpop.permute.xlu0 %1051
    %1055 = vset.pattern.permute.xlu0 0
    %1056 = vperm.xlu0 %1055, %v1048
    %v1057 = vpop.permute.xlu0 %1056
    %v1059 = vmul.f32 %v1045, %v1052
    %v1060 = vmul.f32 %v1046, %v1057
    %1061 = vst.msk [vmem:[#allocation2] sm:$0xff] %vm32, %v1059
    %1062 = vst.msk [vmem:[#allocation2 + $0x8] sm:$0xff] %vm32, %v1060
    // Predicated region
    $region30: #{tpu_custom_call.1} parent=1 // pred_check
      _
    $region31: #{tpu_custom_call.1} parent=1 // pred_check_branch
      %1064 = sbr.rel (0) target = $region33
    $region32: #{tpu_custom_call.1} parent=1 // pred_region
      %1066 = vsyncadd [#allocation3], 0
      %s1067 = sshll.u32 [#allocation2], 4
      %s1068 = int_to_ptr.vmem [resolvable:$true] %s1067
      %s1069 = sshll.u32 %s7, 4
      %s1070 = int_to_ptr.hbm [resolvable:$true] %s1069
      %1075 = dma.vmem_to_hbm [thread:$0]  %s1068, 256, %s1070, [#allocation3], 128, 128, 8
    $region33: #{tpu_custom_call.1} parent=1 // pred_fallthru
      _
    // Predicated region
    $region34: #{tpu_custom_call.1} parent=1 // pred_check
      _
    $region35: #{tpu_custom_call.1} parent=1 // pred_check_branch
      %1077 = sbr.rel (0) target = $region37
    $region36: #{tpu_custom_call.1} parent=1 // pred_region
      %1079 = dma.done [#allocation3], 256
    $region37: #{tpu_custom_call.1} parent=1 // pred_fallthru
      _
    %1080 = vsyncpa [#allocation3], 1

</llo_original>
